<compile_context>
chip_gen: v6e
topology: v6e:2x2x1
jax: 0.10.0
libtpu: 0.0.40
codegen_flags: <defaults>
</compile_context>

<pallas_src>
import functools

import jax
import jax.numpy as jnp
from jax.experimental import pallas as pl
from jax.experimental.pallas import tpu as pltpu


# ------------------------------- kernel -------------------------------------
def _vae_kernel(params_ref, *refs, latent_dim, in_channels, sample):
    """Encode -> clamp -> (sample) -> decode for one (C, rows, 128) pixel slab.

    params_ref: packed f32 scalars in SMEM:
        [w_enc (2L,Cin) row-major | b_enc (2L) | w_dec (Cin,L) row-major | b_dec (Cin)]
    """
    L, C = latent_dim, in_channels
    if sample:
        x_ref, eps_ref, xhat_ref, mean_ref, logvar_ref = refs
    else:
        x_ref, xhat_ref, mean_ref, logvar_ref = refs
        eps_ref = None

    off_be = 2 * L * C
    off_wd = off_be + 2 * L
    off_bd = off_wd + C * L

    def we(r, c):            # encoder weight [r, c]
        return params_ref[r * C + c]

    def be(r):               # encoder bias [r]
        return params_ref[off_be + r]

    def wd(c, r):            # decoder weight [c, r]
        return params_ref[off_wd + c * L + r]

    def bd(c):               # decoder bias [c]
        return params_ref[off_bd + c]

    # Dense (rows, 128) pixel tiles, one per input channel.
    xs = [x_ref[c].astype(jnp.float32) for c in range(C)]

    # Decoder accumulators (built up channel-by-channel to keep live vregs low).
    xh = [None] * C

    for r in range(L):
        # Encoder: mean / logvar rows as scalar-weight FMAs over dense tiles.
        m = be(r) + we(r, 0) * xs[0]
        lv = be(L + r) + we(L + r, 0) * xs[0]
        for c in range(1, C):
            m = m + we(r, c) * xs[c]
            lv = lv + we(L + r, c) * xs[c]
        lv = jnp.clip(lv, -30.0, 20.0)

        # posterior.sample(): z = mean + exp(0.5*logvar) * eps   (or mode(): mean)
        if sample:
            z_r = m + jnp.exp(0.5 * lv) * eps_ref[r].astype(jnp.float32)
        else:
            z_r = m

        mean_ref[r] = m.astype(mean_ref.dtype)
        logvar_ref[r] = lv.astype(logvar_ref.dtype)

        # Decoder contribution of this latent channel.
        for c in range(C):
            term = wd(c, r) * z_r
            xh[c] = term if xh[c] is None else xh[c] + term

    for c in range(C):
        xhat_ref[c] = (xh[c] + bd(c)).astype(xhat_ref.dtype)


# ------------------------------ wrapper --------------------------------------
def _round_up(x, m):
    return ((x + m - 1) // m) * m


def _choose_tiling(HW, max_pixels, want_tiles):
    """Pad HW only as far as needed and pick a (rows-of-128) pixel tile.

    Returns (HW_pad, rows_total, tile_rows) with tile_rows dividing rows_total
    and tile_rows either == rows_total or a multiple of 8 (the (8,128) rule).
    """
    HW_pad = _round_up(HW, 128)
    rows = HW_pad // 128
    max_rows = max(8, max_pixels // 128)
    if rows <= max_rows and (want_tiles <= 1 or rows < 16):
        return HW_pad, rows, rows                       # one full-extent tile
    rows = _round_up(rows, 8)
    HW_pad = rows * 128
    divs = [d for d in range(8, min(rows, max_rows) + 1, 8) if rows % d == 0]
    pref = [d for d in divs if rows // d >= want_tiles]
    tile_rows = max(pref) if pref else max(divs)
    return HW_pad, rows, tile_rows


def vae_forward(x_nchw, w_enc, b_enc, w_dec, b_dec, *, latent_dim,
                eps=None, sample_posterior=True, tile_pixels=32768,
                out_dtype=jnp.float32):
    """Fused VAE forward: returns (x_hat, mean, logvar).

    Args:
      x_nchw: (N, Cin, H, W) input (PyTorch layout, no transpose needed).
      w_enc:  (2L, Cin) encoder 1x1-conv weight;  b_enc: (2L,).
      w_dec:  (Cin, L)  decoder 1x1-conv weight;  b_dec: (Cin,).
      eps:    (N, L, H, W) standard-normal noise (required if sampling).
    """
    N, Cin, H, W = x_nchw.shape
    L = latent_dim
    HW = H * W
    sample = bool(sample_posterior)

    want_tiles = 2 if N < 2 else 1            # keep >=2 grid steps for 2-TC chips
    HW_pad, rows, tile_rows = _choose_tiling(HW, tile_pixels, want_tiles)
    num_tiles = rows // tile_rows

    def to_tiles(a, C):
        a3 = a.reshape(N, C, HW)
        if HW_pad != HW:
            a3 = jnp.pad(a3, ((0, 0), (0, 0), (0, HW_pad - HW)))
        return a3.reshape(N, C, rows, 128)

    def from_tiles(a4, C):
        a3 = a4.reshape(N, C, HW_pad)
        if HW_pad != HW:
            a3 = a3[:, :, :HW]
        return a3.reshape(N, C, H, W)

    x4 = to_tiles(x_nchw, Cin)

    # All ~112 parameters packed into one small f32 array -> SMEM (1 tiny DMA).
    params = jnp.concatenate([
        w_enc.reshape(-1), b_enc.reshape(-1),
        w_dec.reshape(-1), b_dec.reshape(-1)]).astype(jnp.float32)

    def tile_spec(C):
        return pl.BlockSpec((None, C, tile_rows, 128),
                            lambda n, t: (n, 0, t, 0))

    in_specs = [pl.BlockSpec(memory_space=pltpu.MemorySpace.SMEM),  # params
                tile_spec(Cin)]                                      # x
    inputs = [params, x4]
    if sample:
        if eps is None:
            raise ValueError("eps is required when sample_posterior=True")
        in_specs.append(tile_spec(L))
        inputs.append(to_tiles(eps.astype(jnp.float32), L))

    out_shapes = (
        jax.ShapeDtypeStruct((N, Cin, rows, 128), out_dtype),   # x_hat
        jax.ShapeDtypeStruct((N, L, rows, 128), out_dtype),     # mean
        jax.ShapeDtypeStruct((N, L, rows, 128), out_dtype),     # logvar
    )
    out_specs = [tile_spec(Cin), tile_spec(L), tile_spec(L)]

    kernel = functools.partial(_vae_kernel, latent_dim=L, in_channels=Cin,
                               sample=sample)

    # Per-step working set (x + eps + 3 outputs, double-buffered) stays under
    # ~10 MiB at the default tile_pixels, so no vmem_limit override is needed
    # even on v7x (32 MiB scoped default / 64 MiB physical).
    xhat4, mean4, lv4 = pl.pallas_call(
        kernel,
        out_shape=out_shapes,
        grid=(N, num_tiles),
        in_specs=in_specs,
        out_specs=out_specs,
        compiler_params=pltpu.CompilerParams(
            dimension_semantics=("parallel", "parallel")),
    )(*inputs)

    return from_tiles(xhat4, Cin), from_tiles(mean4, L), from_tiles(lv4, L)


# ----------------------------- pure-JAX reference ----------------------------
def _reference_vae(x, w_enc, b_enc, w_dec, b_dec, latent_dim, eps=None):
    moments = jnp.einsum('oc,nchw->nohw', w_enc, x) + b_enc.reshape(1, -1, 1, 1)
    mean = moments[:, :latent_dim]
    logvar = jnp.clip(moments[:, latent_dim:], -30.0, 20.0)
    z = mean if eps is None else mean + jnp.exp(0.5 * logvar) * eps
    x_hat = jnp.einsum('cl,nlhw->nchw', w_dec, z) + b_dec.reshape(1, -1, 1, 1)
    return x_hat, mean, logvar, z


if __name__ == "__main__":
    # Small shapes consistent with the module: batch=2, in_channels=4,
    # spatial=16x16, latent_dim=8 (encoder emits 2*latent_dim moment channels).
    N, Cin, H, W = 2, 4, 16, 16
    LATENT = 8

    key = jax.random.PRNGKey(0)
    k_x, k_we, k_be, k_wd, k_bd, k_eps = jax.random.split(key, 6)

    x = jax.random.normal(k_x, (N, Cin, H, W), dtype=jnp.float32)
    w_enc = 0.1 * jax.random.normal(k_we, (2 * LATENT, Cin), dtype=jnp.float32)
    b_enc = 0.01 * jax.random.normal(k_be, (2 * LATENT,), dtype=jnp.float32)
    w_dec = 0.1 * jax.random.normal(k_wd, (Cin, LATENT), dtype=jnp.float32)
    b_dec = 0.01 * jax.random.normal(k_bd, (Cin,), dtype=jnp.float32)
    eps = jax.random.normal(k_eps, (N, LATENT, H, W), dtype=jnp.float32)

    # Sampled-posterior forward (sample_posterior=True path of VAE.forward).
    x_hat, mean, logvar = vae_forward(
        x, w_enc, b_enc, w_dec, b_dec, latent_dim=LATENT, eps=eps,
        sample_posterior=True)
    jax.block_until_ready((x_hat, mean, logvar))

    assert x_hat.shape == (N, Cin, H, W)
    assert mean.shape == (N, LATENT, H, W)
    assert logvar.shape == (N, LATENT, H, W)

    ref_xhat, ref_mean, ref_logvar, ref_z = _reference_vae(
        x, w_enc, b_enc, w_dec, b_dec, LATENT, eps=eps)
    assert jnp.allclose(mean, ref_mean, atol=1e-5, rtol=1e-4)
    assert jnp.allclose(logvar, ref_logvar, atol=1e-5, rtol=1e-4)
    assert jnp.allclose(x_hat, ref_xhat, atol=1e-5, rtol=1e-4)
    # The posterior really sampled (z != mean), and x_hat used the sampled z.
    assert float(jnp.max(jnp.abs(ref_z - ref_mean))) > 1e-3
    ref_xhat_mode = _reference_vae(x, w_enc, b_enc, w_dec, b_dec, LATENT)[0]
    assert float(jnp.max(jnp.abs(x_hat - ref_xhat_mode))) > 1e-3

    # mode() path (sample_posterior=False): decode(mean).
    x_hat_m, mean_m, logvar_m = vae_forward(
        x, w_enc, b_enc, w_dec, b_dec, latent_dim=LATENT,
        sample_posterior=False)
    jax.block_until_ready((x_hat_m, mean_m, logvar_m))
    assert jnp.allclose(mean_m, ref_mean, atol=1e-5, rtol=1e-4)
    assert jnp.allclose(logvar_m, ref_logvar, atol=1e-5, rtol=1e-4)
    assert jnp.allclose(x_hat_m, ref_xhat_mode, atol=1e-5, rtol=1e-4)

    # bf16-output path (halves HBM output traffic on bandwidth-bound chips).
    xb, mb, lb = vae_forward(
        x, w_enc, b_enc, w_dec, b_dec, latent_dim=LATENT, eps=eps,
        sample_posterior=True, out_dtype=jnp.bfloat16)
    jax.block_until_ready((xb, mb, lb))
    assert jnp.allclose(xb.astype(jnp.float32), ref_xhat, atol=5e-2, rtol=5e-2)
    assert jnp.allclose(mb.astype(jnp.float32), ref_mean, atol=5e-2, rtol=5e-2)

    print("KERNEL_OK")
</pallas_src>

<mosaic_0001>
module attributes {stable_mosaic.version = 11 : i64} {
  func.func @_vae_kernel(%arg0: i32, %arg1: i32, %arg2: memref<116xf32, #tpu.memory_space<smem>>, %arg3: memref<1x4x2x128xf32, #tpu.memory_space<vmem>>, %arg4: memref<1x8x2x128xf32, #tpu.memory_space<vmem>>, %arg5: memref<1x4x2x128xf32, #tpu.memory_space<vmem>>, %arg6: memref<1x8x2x128xf32, #tpu.memory_space<vmem>>, %arg7: memref<1x8x2x128xf32, #tpu.memory_space<vmem>>) attributes {dimension_semantics = [#tpu.dimension_semantics<parallel>, #tpu.dimension_semantics<parallel>], iteration_bounds = array<i64: 2, 1>, scalar_prefetch = 0 : i64, scratch_operands = 0 : i64, tpu.core_type = #tpu.core_type<tc>, window_params = [{transform_indices = @transform_0, window_bounds = array<i64: 116>}, {transform_indices = @transform_1, window_bounds = array<i64: 1, 4, 2, 128>}, {transform_indices = @transform_2, window_bounds = array<i64: 1, 8, 2, 128>}, {transform_indices = @transform_3, window_bounds = array<i64: 1, 4, 2, 128>}, {transform_indices = @transform_4, window_bounds = array<i64: 1, 8, 2, 128>}, {transform_indices = @transform_5, window_bounds = array<i64: 1, 8, 2, 128>}]} {
    %c0 = arith.constant 0 : index
    %c0_0 = arith.constant 0 : index
    %c0_1 = arith.constant 0 : index
    %c0_2 = arith.constant 0 : index
    %0 = vector.load %arg3[%c0, %c0_0, %c0_1, %c0_2] : memref<1x4x2x128xf32, #tpu.memory_space<vmem>>, vector<1x1x2x128xf32>
    %1 = vector.shape_cast %0 : vector<1x1x2x128xf32> to vector<2x128xf32>
    %c0_3 = arith.constant 0 : index
    %c1 = arith.constant 1 : index
    %c0_4 = arith.constant 0 : index
    %c0_5 = arith.constant 0 : index
    %2 = vector.load %arg3[%c0_3, %c1, %c0_4, %c0_5] : memref<1x4x2x128xf32, #tpu.memory_space<vmem>>, vector<1x1x2x128xf32>
    %3 = vector.shape_cast %2 : vector<1x1x2x128xf32> to vector<2x128xf32>
    %c0_6 = arith.constant 0 : index
    %c2 = arith.constant 2 : index
    %c0_7 = arith.constant 0 : index
    %c0_8 = arith.constant 0 : index
    %4 = vector.load %arg3[%c0_6, %c2, %c0_7, %c0_8] : memref<1x4x2x128xf32, #tpu.memory_space<vmem>>, vector<1x1x2x128xf32>
    %5 = vector.shape_cast %4 : vector<1x1x2x128xf32> to vector<2x128xf32>
    %c0_9 = arith.constant 0 : index
    %c3 = arith.constant 3 : index
    %c0_10 = arith.constant 0 : index
    %c0_11 = arith.constant 0 : index
    %6 = vector.load %arg3[%c0_9, %c3, %c0_10, %c0_11] : memref<1x4x2x128xf32, #tpu.memory_space<vmem>>, vector<1x1x2x128xf32>
    %7 = vector.shape_cast %6 : vector<1x1x2x128xf32> to vector<2x128xf32>
    %c64 = arith.constant 64 : index
    %8 = memref.load %arg2[%c64] : memref<116xf32, #tpu.memory_space<smem>>
    %c0_12 = arith.constant 0 : index
    %9 = memref.load %arg2[%c0_12] : memref<116xf32, #tpu.memory_space<smem>>
    %10 = vector.broadcast %9 : f32 to vector<2x128xf32>
    %11 = arith.mulf %10, %1 : vector<2x128xf32>
    %12 = vector.broadcast %8 : f32 to vector<2x128xf32>
    %13 = arith.addf %12, %11 : vector<2x128xf32>
    %c72 = arith.constant 72 : index
    %14 = memref.load %arg2[%c72] : memref<116xf32, #tpu.memory_space<smem>>
    %c32 = arith.constant 32 : index
    %15 = memref.load %arg2[%c32] : memref<116xf32, #tpu.memory_space<smem>>
    %16 = vector.broadcast %15 : f32 to vector<2x128xf32>
    %17 = arith.mulf %16, %1 : vector<2x128xf32>
    %18 = vector.broadcast %14 : f32 to vector<2x128xf32>
    %19 = arith.addf %18, %17 : vector<2x128xf32>
    %c1_13 = arith.constant 1 : index
    %20 = memref.load %arg2[%c1_13] : memref<116xf32, #tpu.memory_space<smem>>
    %21 = vector.broadcast %20 : f32 to vector<2x128xf32>
    %22 = arith.mulf %21, %3 : vector<2x128xf32>
    %23 = arith.addf %13, %22 : vector<2x128xf32>
    %c33 = arith.constant 33 : index
    %24 = memref.load %arg2[%c33] : memref<116xf32, #tpu.memory_space<smem>>
    %25 = vector.broadcast %24 : f32 to vector<2x128xf32>
    %26 = arith.mulf %25, %3 : vector<2x128xf32>
    %27 = arith.addf %19, %26 : vector<2x128xf32>
    %c2_14 = arith.constant 2 : index
    %28 = memref.load %arg2[%c2_14] : memref<116xf32, #tpu.memory_space<smem>>
    %29 = vector.broadcast %28 : f32 to vector<2x128xf32>
    %30 = arith.mulf %29, %5 : vector<2x128xf32>
    %31 = arith.addf %23, %30 : vector<2x128xf32>
    %c34 = arith.constant 34 : index
    %32 = memref.load %arg2[%c34] : memref<116xf32, #tpu.memory_space<smem>>
    %33 = vector.broadcast %32 : f32 to vector<2x128xf32>
    %34 = arith.mulf %33, %5 : vector<2x128xf32>
    %35 = arith.addf %27, %34 : vector<2x128xf32>
    %c3_15 = arith.constant 3 : index
    %36 = memref.load %arg2[%c3_15] : memref<116xf32, #tpu.memory_space<smem>>
    %37 = vector.broadcast %36 : f32 to vector<2x128xf32>
    %38 = arith.mulf %37, %7 : vector<2x128xf32>
    %39 = arith.addf %31, %38 : vector<2x128xf32>
    %c35 = arith.constant 35 : index
    %40 = memref.load %arg2[%c35] : memref<116xf32, #tpu.memory_space<smem>>
    %41 = vector.broadcast %40 : f32 to vector<2x128xf32>
    %42 = arith.mulf %41, %7 : vector<2x128xf32>
    %43 = arith.addf %35, %42 : vector<2x128xf32>
    %cst = arith.constant -3.000000e+01 : f32
    %cst_16 = arith.constant 2.000000e+01 : f32
    %44 = vector.broadcast %cst : f32 to vector<2x128xf32>
    %45 = arith.maximumf %44, %43 : vector<2x128xf32>
    %46 = vector.broadcast %cst_16 : f32 to vector<2x128xf32>
    %47 = arith.minimumf %46, %45 : vector<2x128xf32>
    %cst_17 = arith.constant 5.000000e-01 : f32
    %48 = vector.broadcast %cst_17 : f32 to vector<2x128xf32>
    %49 = arith.mulf %48, %47 : vector<2x128xf32>
    %50 = math.exp %49 : vector<2x128xf32>
    %c0_18 = arith.constant 0 : index
    %c0_19 = arith.constant 0 : index
    %c0_20 = arith.constant 0 : index
    %c0_21 = arith.constant 0 : index
    %51 = vector.load %arg4[%c0_18, %c0_19, %c0_20, %c0_21] : memref<1x8x2x128xf32, #tpu.memory_space<vmem>>, vector<1x1x2x128xf32>
    %52 = vector.shape_cast %51 : vector<1x1x2x128xf32> to vector<2x128xf32>
    %53 = arith.mulf %50, %52 : vector<2x128xf32>
    %54 = arith.addf %39, %53 : vector<2x128xf32>
    %c0_22 = arith.constant 0 : index
    %c0_23 = arith.constant 0 : index
    %c0_24 = arith.constant 0 : index
    %c0_25 = arith.constant 0 : index
    %55 = vector.load %arg6[%c0_22, %c0_23, %c0_24, %c0_25] : memref<1x8x2x128xf32, #tpu.memory_space<vmem>>, vector<1x1x2x128xf32>
    %56 = vector.shape_cast %55 : vector<1x1x2x128xf32> to vector<2x128xf32>
    %57 = vector.shape_cast %39 : vector<2x128xf32> to vector<1x1x2x128xf32>
    tpu.vector_store %arg6[%c0_22, %c0_23, %c0_24, %c0_25], %57 {strides = array<i32>} : memref<1x8x2x128xf32, #tpu.memory_space<vmem>>, vector<1x1x2x128xf32>,
    %c0_26 = arith.constant 0 : index
    %c0_27 = arith.constant 0 : index
    %c0_28 = arith.constant 0 : index
    %c0_29 = arith.constant 0 : index
    %58 = vector.load %arg7[%c0_26, %c0_27, %c0_28, %c0_29] : memref<1x8x2x128xf32, #tpu.memory_space<vmem>>, vector<1x1x2x128xf32>
    %59 = vector.shape_cast %58 : vector<1x1x2x128xf32> to vector<2x128xf32>
    %60 = vector.shape_cast %47 : vector<2x128xf32> to vector<1x1x2x128xf32>
    tpu.vector_store %arg7[%c0_26, %c0_27, %c0_28, %c0_29], %60 {strides = array<i32>} : memref<1x8x2x128xf32, #tpu.memory_space<vmem>>, vector<1x1x2x128xf32>,
    %c80 = arith.constant 80 : index
    %61 = memref.load %arg2[%c80] : memref<116xf32, #tpu.memory_space<smem>>
    %62 = vector.broadcast %61 : f32 to vector<2x128xf32>
    %63 = arith.mulf %62, %54 : vector<2x128xf32>
    %c88 = arith.constant 88 : index
    %64 = memref.load %arg2[%c88] : memref<116xf32, #tpu.memory_space<smem>>
    %65 = vector.broadcast %64 : f32 to vector<2x128xf32>
    %66 = arith.mulf %65, %54 : vector<2x128xf32>
    %c96 = arith.constant 96 : index
    %67 = memref.load %arg2[%c96] : memref<116xf32, #tpu.memory_space<smem>>
    %68 = vector.broadcast %67 : f32 to vector<2x128xf32>
    %69 = arith.mulf %68, %54 : vector<2x128xf32>
    %c104 = arith.constant 104 : index
    %70 = memref.load %arg2[%c104] : memref<116xf32, #tpu.memory_space<smem>>
    %71 = vector.broadcast %70 : f32 to vector<2x128xf32>
    %72 = arith.mulf %71, %54 : vector<2x128xf32>
    %c65 = arith.constant 65 : index
    %73 = memref.load %arg2[%c65] : memref<116xf32, #tpu.memory_space<smem>>
    %c4 = arith.constant 4 : index
    %74 = memref.load %arg2[%c4] : memref<116xf32, #tpu.memory_space<smem>>
    %75 = vector.broadcast %74 : f32 to vector<2x128xf32>
    %76 = arith.mulf %75, %1 : vector<2x128xf32>
    %77 = vector.broadcast %73 : f32 to vector<2x128xf32>
    %78 = arith.addf %77, %76 : vector<2x128xf32>
    %c73 = arith.constant 73 : index
    %79 = memref.load %arg2[%c73] : memref<116xf32, #tpu.memory_space<smem>>
    %c36 = arith.constant 36 : index
    %80 = memref.load %arg2[%c36] : memref<116xf32, #tpu.memory_space<smem>>
    %81 = vector.broadcast %80 : f32 to vector<2x128xf32>
    %82 = arith.mulf %81, %1 : vector<2x128xf32>
    %83 = vector.broadcast %79 : f32 to vector<2x128xf32>
    %84 = arith.addf %83, %82 : vector<2x128xf32>
    %c5 = arith.constant 5 : index
    %85 = memref.load %arg2[%c5] : memref<116xf32, #tpu.memory_space<smem>>
    %86 = vector.broadcast %85 : f32 to vector<2x128xf32>
    %87 = arith.mulf %86, %3 : vector<2x128xf32>
    %88 = arith.addf %78, %87 : vector<2x128xf32>
    %c37 = arith.constant 37 : index
    %89 = memref.load %arg2[%c37] : memref<116xf32, #tpu.memory_space<smem>>
    %90 = vector.broadcast %89 : f32 to vector<2x128xf32>
    %91 = arith.mulf %90, %3 : vector<2x128xf32>
    %92 = arith.addf %84, %91 : vector<2x128xf32>
    %c6 = arith.constant 6 : index
    %93 = memref.load %arg2[%c6] : memref<116xf32, #tpu.memory_space<smem>>
    %94 = vector.broadcast %93 : f32 to vector<2x128xf32>
    %95 = arith.mulf %94, %5 : vector<2x128xf32>
    %96 = arith.addf %88, %95 : vector<2x128xf32>
    %c38 = arith.constant 38 : index
    %97 = memref.load %arg2[%c38] : memref<116xf32, #tpu.memory_space<smem>>
    %98 = vector.broadcast %97 : f32 to vector<2x128xf32>
    %99 = arith.mulf %98, %5 : vector<2x128xf32>
    %100 = arith.addf %92, %99 : vector<2x128xf32>
    %c7 = arith.constant 7 : index
    %101 = memref.load %arg2[%c7] : memref<116xf32, #tpu.memory_space<smem>>
    %102 = vector.broadcast %101 : f32 to vector<2x128xf32>
    %103 = arith.mulf %102, %7 : vector<2x128xf32>
    %104 = arith.addf %96, %103 : vector<2x128xf32>
    %c39 = arith.constant 39 : index
    %105 = memref.load %arg2[%c39] : memref<116xf32, #tpu.memory_space<smem>>
    %106 = vector.broadcast %105 : f32 to vector<2x128xf32>
    %107 = arith.mulf %106, %7 : vector<2x128xf32>
    %108 = arith.addf %100, %107 : vector<2x128xf32>
    %cst_30 = arith.constant -3.000000e+01 : f32
    %cst_31 = arith.constant 2.000000e+01 : f32
    %109 = vector.broadcast %cst_30 : f32 to vector<2x128xf32>
    %110 = arith.maximumf %109, %108 : vector<2x128xf32>
    %111 = vector.broadcast %cst_31 : f32 to vector<2x128xf32>
    %112 = arith.minimumf %111, %110 : vector<2x128xf32>
    %cst_32 = arith.constant 5.000000e-01 : f32
    %113 = vector.broadcast %cst_32 : f32 to vector<2x128xf32>
    %114 = arith.mulf %113, %112 : vector<2x128xf32>
    %115 = math.exp %114 : vector<2x128xf32>
    %c0_33 = arith.constant 0 : index
    %c1_34 = arith.constant 1 : index
    %c0_35 = arith.constant 0 : index
    %c0_36 = arith.constant 0 : index
    %116 = vector.load %arg4[%c0_33, %c1_34, %c0_35, %c0_36] : memref<1x8x2x128xf32, #tpu.memory_space<vmem>>, vector<1x1x2x128xf32>
    %117 = vector.shape_cast %116 : vector<1x1x2x128xf32> to vector<2x128xf32>
    %118 = arith.mulf %115, %117 : vector<2x128xf32>
    %119 = arith.addf %104, %118 : vector<2x128xf32>
    %c0_37 = arith.constant 0 : index
    %c1_38 = arith.constant 1 : index
    %c0_39 = arith.constant 0 : index
    %c0_40 = arith.constant 0 : index
    %120 = vector.load %arg6[%c0_37, %c1_38, %c0_39, %c0_40] : memref<1x8x2x128xf32, #tpu.memory_space<vmem>>, vector<1x1x2x128xf32>
    %121 = vector.shape_cast %120 : vector<1x1x2x128xf32> to vector<2x128xf32>
    %122 = vector.shape_cast %104 : vector<2x128xf32> to vector<1x1x2x128xf32>
    tpu.vector_store %arg6[%c0_37, %c1_38, %c0_39, %c0_40], %122 {strides = array<i32>} : memref<1x8x2x128xf32, #tpu.memory_space<vmem>>, vector<1x1x2x128xf32>,
    %c0_41 = arith.constant 0 : index
    %c1_42 = arith.constant 1 : index
    %c0_43 = arith.constant 0 : index
    %c0_44 = arith.constant 0 : index
    %123 = vector.load %arg7[%c0_41, %c1_42, %c0_43, %c0_44] : memref<1x8x2x128xf32, #tpu.memory_space<vmem>>, vector<1x1x2x128xf32>
    %124 = vector.shape_cast %123 : vector<1x1x2x128xf32> to vector<2x128xf32>
    %125 = vector.shape_cast %112 : vector<2x128xf32> to vector<1x1x2x128xf32>
    tpu.vector_store %arg7[%c0_41, %c1_42, %c0_43, %c0_44], %125 {strides = array<i32>} : memref<1x8x2x128xf32, #tpu.memory_space<vmem>>, vector<1x1x2x128xf32>,
    %c81 = arith.constant 81 : index
    %126 = memref.load %arg2[%c81] : memref<116xf32, #tpu.memory_space<smem>>
    %127 = vector.broadcast %126 : f32 to vector<2x128xf32>
    %128 = arith.mulf %127, %119 : vector<2x128xf32>
    %129 = arith.addf %63, %128 : vector<2x128xf32>
    %c89 = arith.constant 89 : index
    %130 = memref.load %arg2[%c89] : memref<116xf32, #tpu.memory_space<smem>>
    %131 = vector.broadcast %130 : f32 to vector<2x128xf32>
    %132 = arith.mulf %131, %119 : vector<2x128xf32>
    %133 = arith.addf %66, %132 : vector<2x128xf32>
    %c97 = arith.constant 97 : index
    %134 = memref.load %arg2[%c97] : memref<116xf32, #tpu.memory_space<smem>>
    %135 = vector.broadcast %134 : f32 to vector<2x128xf32>
    %136 = arith.mulf %135, %119 : vector<2x128xf32>
    %137 = arith.addf %69, %136 : vector<2x128xf32>
    %c105 = arith.constant 105 : index
    %138 = memref.load %arg2[%c105] : memref<116xf32, #tpu.memory_space<smem>>
    %139 = vector.broadcast %138 : f32 to vector<2x128xf32>
    %140 = arith.mulf %139, %119 : vector<2x128xf32>
    %141 = arith.addf %72, %140 : vector<2x128xf32>
    %c66 = arith.constant 66 : index
    %142 = memref.load %arg2[%c66] : memref<116xf32, #tpu.memory_space<smem>>
    %c8 = arith.constant 8 : index
    %143 = memref.load %arg2[%c8] : memref<116xf32, #tpu.memory_space<smem>>
    %144 = vector.broadcast %143 : f32 to vector<2x128xf32>
    %145 = arith.mulf %144, %1 : vector<2x128xf32>
    %146 = vector.broadcast %142 : f32 to vector<2x128xf32>
    %147 = arith.addf %146, %145 : vector<2x128xf32>
    %c74 = arith.constant 74 : index
    %148 = memref.load %arg2[%c74] : memref<116xf32, #tpu.memory_space<smem>>
    %c40 = arith.constant 40 : index
    %149 = memref.load %arg2[%c40] : memref<116xf32, #tpu.memory_space<smem>>
    %150 = vector.broadcast %149 : f32 to vector<2x128xf32>
    %151 = arith.mulf %150, %1 : vector<2x128xf32>
    %152 = vector.broadcast %148 : f32 to vector<2x128xf32>
    %153 = arith.addf %152, %151 : vector<2x128xf32>
    %c9 = arith.constant 9 : index
    %154 = memref.load %arg2[%c9] : memref<116xf32, #tpu.memory_space<smem>>
    %155 = vector.broadcast %154 : f32 to vector<2x128xf32>
    %156 = arith.mulf %155, %3 : vector<2x128xf32>
    %157 = arith.addf %147, %156 : vector<2x128xf32>
    %c41 = arith.constant 41 : index
    %158 = memref.load %arg2[%c41] : memref<116xf32, #tpu.memory_space<smem>>
    %159 = vector.broadcast %158 : f32 to vector<2x128xf32>
    %160 = arith.mulf %159, %3 : vector<2x128xf32>
    %161 = arith.addf %153, %160 : vector<2x128xf32>
    %c10 = arith.constant 10 : index
    %162 = memref.load %arg2[%c10] : memref<116xf32, #tpu.memory_space<smem>>
    %163 = vector.broadcast %162 : f32 to vector<2x128xf32>
    %164 = arith.mulf %163, %5 : vector<2x128xf32>
    %165 = arith.addf %157, %164 : vector<2x128xf32>
    %c42 = arith.constant 42 : index
    %166 = memref.load %arg2[%c42] : memref<116xf32, #tpu.memory_space<smem>>
    %167 = vector.broadcast %166 : f32 to vector<2x128xf32>
    %168 = arith.mulf %167, %5 : vector<2x128xf32>
    %169 = arith.addf %161, %168 : vector<2x128xf32>
    %c11 = arith.constant 11 : index
    %170 = memref.load %arg2[%c11] : memref<116xf32, #tpu.memory_space<smem>>
    %171 = vector.broadcast %170 : f32 to vector<2x128xf32>
    %172 = arith.mulf %171, %7 : vector<2x128xf32>
    %173 = arith.addf %165, %172 : vector<2x128xf32>
    %c43 = arith.constant 43 : index
    %174 = memref.load %arg2[%c43] : memref<116xf32, #tpu.memory_space<smem>>
    %175 = vector.broadcast %174 : f32 to vector<2x128xf32>
    %176 = arith.mulf %175, %7 : vector<2x128xf32>
    %177 = arith.addf %169, %176 : vector<2x128xf32>
    %cst_45 = arith.constant -3.000000e+01 : f32
    %cst_46 = arith.constant 2.000000e+01 : f32
    %178 = vector.broadcast %cst_45 : f32 to vector<2x128xf32>
    %179 = arith.maximumf %178, %177 : vector<2x128xf32>
    %180 = vector.broadcast %cst_46 : f32 to vector<2x128xf32>
    %181 = arith.minimumf %180, %179 : vector<2x128xf32>
    %cst_47 = arith.constant 5.000000e-01 : f32
    %182 = vector.broadcast %cst_47 : f32 to vector<2x128xf32>
    %183 = arith.mulf %182, %181 : vector<2x128xf32>
    %184 = math.exp %183 : vector<2x128xf32>
    %c0_48 = arith.constant 0 : index
    %c2_49 = arith.constant 2 : index
    %c0_50 = arith.constant 0 : index
    %c0_51 = arith.constant 0 : index
    %185 = vector.load %arg4[%c0_48, %c2_49, %c0_50, %c0_51] : memref<1x8x2x128xf32, #tpu.memory_space<vmem>>, vector<1x1x2x128xf32>
    %186 = vector.shape_cast %185 : vector<1x1x2x128xf32> to vector<2x128xf32>
    %187 = arith.mulf %184, %186 : vector<2x128xf32>
    %188 = arith.addf %173, %187 : vector<2x128xf32>
    %c0_52 = arith.constant 0 : index
    %c2_53 = arith.constant 2 : index
    %c0_54 = arith.constant 0 : index
    %c0_55 = arith.constant 0 : index
    %189 = vector.load %arg6[%c0_52, %c2_53, %c0_54, %c0_55] : memref<1x8x2x128xf32, #tpu.memory_space<vmem>>, vector<1x1x2x128xf32>
    %190 = vector.shape_cast %189 : vector<1x1x2x128xf32> to vector<2x128xf32>
    %191 = vector.shape_cast %173 : vector<2x128xf32> to vector<1x1x2x128xf32>
    tpu.vector_store %arg6[%c0_52, %c2_53, %c0_54, %c0_55], %191 {strides = array<i32>} : memref<1x8x2x128xf32, #tpu.memory_space<vmem>>, vector<1x1x2x128xf32>,
    %c0_56 = arith.constant 0 : index
    %c2_57 = arith.constant 2 : index
    %c0_58 = arith.constant 0 : index
    %c0_59 = arith.constant 0 : index
    %192 = vector.load %arg7[%c0_56, %c2_57, %c0_58, %c0_59] : memref<1x8x2x128xf32, #tpu.memory_space<vmem>>, vector<1x1x2x128xf32>
    %193 = vector.shape_cast %192 : vector<1x1x2x128xf32> to vector<2x128xf32>
    %194 = vector.shape_cast %181 : vector<2x128xf32> to vector<1x1x2x128xf32>
    tpu.vector_store %arg7[%c0_56, %c2_57, %c0_58, %c0_59], %194 {strides = array<i32>} : memref<1x8x2x128xf32, #tpu.memory_space<vmem>>, vector<1x1x2x128xf32>,
    %c82 = arith.constant 82 : index
    %195 = memref.load %arg2[%c82] : memref<116xf32, #tpu.memory_space<smem>>
    %196 = vector.broadcast %195 : f32 to vector<2x128xf32>
    %197 = arith.mulf %196, %188 : vector<2x128xf32>
    %198 = arith.addf %129, %197 : vector<2x128xf32>
    %c90 = arith.constant 90 : index
    %199 = memref.load %arg2[%c90] : memref<116xf32, #tpu.memory_space<smem>>
    %200 = vector.broadcast %199 : f32 to vector<2x128xf32>
    %201 = arith.mulf %200, %188 : vector<2x128xf32>
    %202 = arith.addf %133, %201 : vector<2x128xf32>
    %c98 = arith.constant 98 : index
    %203 = memref.load %arg2[%c98] : memref<116xf32, #tpu.memory_space<smem>>
    %204 = vector.broadcast %203 : f32 to vector<2x128xf32>
    %205 = arith.mulf %204, %188 : vector<2x128xf32>
    %206 = arith.addf %137, %205 : vector<2x128xf32>
    %c106 = arith.constant 106 : index
    %207 = memref.load %arg2[%c106] : memref<116xf32, #tpu.memory_space<smem>>
    %208 = vector.broadcast %207 : f32 to vector<2x128xf32>
    %209 = arith.mulf %208, %188 : vector<2x128xf32>
    %210 = arith.addf %141, %209 : vector<2x128xf32>
    %c67 = arith.constant 67 : index
    %211 = memref.load %arg2[%c67] : memref<116xf32, #tpu.memory_space<smem>>
    %c12 = arith.constant 12 : index
    %212 = memref.load %arg2[%c12] : memref<116xf32, #tpu.memory_space<smem>>
    %213 = vector.broadcast %212 : f32 to vector<2x128xf32>
    %214 = arith.mulf %213, %1 : vector<2x128xf32>
    %215 = vector.broadcast %211 : f32 to vector<2x128xf32>
    %216 = arith.addf %215, %214 : vector<2x128xf32>
    %c75 = arith.constant 75 : index
    %217 = memref.load %arg2[%c75] : memref<116xf32, #tpu.memory_space<smem>>
    %c44 = arith.constant 44 : index
    %218 = memref.load %arg2[%c44] : memref<116xf32, #tpu.memory_space<smem>>
    %219 = vector.broadcast %218 : f32 to vector<2x128xf32>
    %220 = arith.mulf %219, %1 : vector<2x128xf32>
    %221 = vector.broadcast %217 : f32 to vector<2x128xf32>
    %222 = arith.addf %221, %220 : vector<2x128xf32>
    %c13 = arith.constant 13 : index
    %223 = memref.load %arg2[%c13] : memref<116xf32, #tpu.memory_space<smem>>
    %224 = vector.broadcast %223 : f32 to vector<2x128xf32>
    %225 = arith.mulf %224, %3 : vector<2x128xf32>
    %226 = arith.addf %216, %225 : vector<2x128xf32>
    %c45 = arith.constant 45 : index
    %227 = memref.load %arg2[%c45] : memref<116xf32, #tpu.memory_space<smem>>
    %228 = vector.broadcast %227 : f32 to vector<2x128xf32>
    %229 = arith.mulf %228, %3 : vector<2x128xf32>
    %230 = arith.addf %222, %229 : vector<2x128xf32>
    %c14 = arith.constant 14 : index
    %231 = memref.load %arg2[%c14] : memref<116xf32, #tpu.memory_space<smem>>
    %232 = vector.broadcast %231 : f32 to vector<2x128xf32>
    %233 = arith.mulf %232, %5 : vector<2x128xf32>
    %234 = arith.addf %226, %233 : vector<2x128xf32>
    %c46 = arith.constant 46 : index
    %235 = memref.load %arg2[%c46] : memref<116xf32, #tpu.memory_space<smem>>
    %236 = vector.broadcast %235 : f32 to vector<2x128xf32>
    %237 = arith.mulf %236, %5 : vector<2x128xf32>
    %238 = arith.addf %230, %237 : vector<2x128xf32>
    %c15 = arith.constant 15 : index
    %239 = memref.load %arg2[%c15] : memref<116xf32, #tpu.memory_space<smem>>
    %240 = vector.broadcast %239 : f32 to vector<2x128xf32>
    %241 = arith.mulf %240, %7 : vector<2x128xf32>
    %242 = arith.addf %234, %241 : vector<2x128xf32>
    %c47 = arith.constant 47 : index
    %243 = memref.load %arg2[%c47] : memref<116xf32, #tpu.memory_space<smem>>
    %244 = vector.broadcast %243 : f32 to vector<2x128xf32>
    %245 = arith.mulf %244, %7 : vector<2x128xf32>
    %246 = arith.addf %238, %245 : vector<2x128xf32>
    %cst_60 = arith.constant -3.000000e+01 : f32
    %cst_61 = arith.constant 2.000000e+01 : f32
    %247 = vector.broadcast %cst_60 : f32 to vector<2x128xf32>
    %248 = arith.maximumf %247, %246 : vector<2x128xf32>
    %249 = vector.broadcast %cst_61 : f32 to vector<2x128xf32>
    %250 = arith.minimumf %249, %248 : vector<2x128xf32>
    %cst_62 = arith.constant 5.000000e-01 : f32
    %251 = vector.broadcast %cst_62 : f32 to vector<2x128xf32>
    %252 = arith.mulf %251, %250 : vector<2x128xf32>
    %253 = math.exp %252 : vector<2x128xf32>
    %c0_63 = arith.constant 0 : index
    %c3_64 = arith.constant 3 : index
    %c0_65 = arith.constant 0 : index
    %c0_66 = arith.constant 0 : index
    %254 = vector.load %arg4[%c0_63, %c3_64, %c0_65, %c0_66] : memref<1x8x2x128xf32, #tpu.memory_space<vmem>>, vector<1x1x2x128xf32>
    %255 = vector.shape_cast %254 : vector<1x1x2x128xf32> to vector<2x128xf32>
    %256 = arith.mulf %253, %255 : vector<2x128xf32>
    %257 = arith.addf %242, %256 : vector<2x128xf32>
    %c0_67 = arith.constant 0 : index
    %c3_68 = arith.constant 3 : index
    %c0_69 = arith.constant 0 : index
    %c0_70 = arith.constant 0 : index
    %258 = vector.load %arg6[%c0_67, %c3_68, %c0_69, %c0_70] : memref<1x8x2x128xf32, #tpu.memory_space<vmem>>, vector<1x1x2x128xf32>
    %259 = vector.shape_cast %258 : vector<1x1x2x128xf32> to vector<2x128xf32>
    %260 = vector.shape_cast %242 : vector<2x128xf32> to vector<1x1x2x128xf32>
    tpu.vector_store %arg6[%c0_67, %c3_68, %c0_69, %c0_70], %260 {strides = array<i32>} : memref<1x8x2x128xf32, #tpu.memory_space<vmem>>, vector<1x1x2x128xf32>,
    %c0_71 = arith.constant 0 : index
    %c3_72 = arith.constant 3 : index
    %c0_73 = arith.constant 0 : index
    %c0_74 = arith.constant 0 : index
    %261 = vector.load %arg7[%c0_71, %c3_72, %c0_73, %c0_74] : memref<1x8x2x128xf32, #tpu.memory_space<vmem>>, vector<1x1x2x128xf32>
    %262 = vector.shape_cast %261 : vector<1x1x2x128xf32> to vector<2x128xf32>
    %263 = vector.shape_cast %250 : vector<2x128xf32> to vector<1x1x2x128xf32>
    tpu.vector_store %arg7[%c0_71, %c3_72, %c0_73, %c0_74], %263 {strides = array<i32>} : memref<1x8x2x128xf32, #tpu.memory_space<vmem>>, vector<1x1x2x128xf32>,
    %c83 = arith.constant 83 : index
    %264 = memref.load %arg2[%c83] : memref<116xf32, #tpu.memory_space<smem>>
    %265 = vector.broadcast %264 : f32 to vector<2x128xf32>
    %266 = arith.mulf %265, %257 : vector<2x128xf32>
    %267 = arith.addf %198, %266 : vector<2x128xf32>
    %c91 = arith.constant 91 : index
    %268 = memref.load %arg2[%c91] : memref<116xf32, #tpu.memory_space<smem>>
    %269 = vector.broadcast %268 : f32 to vector<2x128xf32>
    %270 = arith.mulf %269, %257 : vector<2x128xf32>
    %271 = arith.addf %202, %270 : vector<2x128xf32>
    %c99 = arith.constant 99 : index
    %272 = memref.load %arg2[%c99] : memref<116xf32, #tpu.memory_space<smem>>
    %273 = vector.broadcast %272 : f32 to vector<2x128xf32>
    %274 = arith.mulf %273, %257 : vector<2x128xf32>
    %275 = arith.addf %206, %274 : vector<2x128xf32>
    %c107 = arith.constant 107 : index
    %276 = memref.load %arg2[%c107] : memref<116xf32, #tpu.memory_space<smem>>
    %277 = vector.broadcast %276 : f32 to vector<2x128xf32>
    %278 = arith.mulf %277, %257 : vector<2x128xf32>
    %279 = arith.addf %210, %278 : vector<2x128xf32>
    %c68 = arith.constant 68 : index
    %280 = memref.load %arg2[%c68] : memref<116xf32, #tpu.memory_space<smem>>
    %c16 = arith.constant 16 : index
    %281 = memref.load %arg2[%c16] : memref<116xf32, #tpu.memory_space<smem>>
    %282 = vector.broadcast %281 : f32 to vector<2x128xf32>
    %283 = arith.mulf %282, %1 : vector<2x128xf32>
    %284 = vector.broadcast %280 : f32 to vector<2x128xf32>
    %285 = arith.addf %284, %283 : vector<2x128xf32>
    %c76 = arith.constant 76 : index
    %286 = memref.load %arg2[%c76] : memref<116xf32, #tpu.memory_space<smem>>
    %c48 = arith.constant 48 : index
    %287 = memref.load %arg2[%c48] : memref<116xf32, #tpu.memory_space<smem>>
    %288 = vector.broadcast %287 : f32 to vector<2x128xf32>
    %289 = arith.mulf %288, %1 : vector<2x128xf32>
    %290 = vector.broadcast %286 : f32 to vector<2x128xf32>
    %291 = arith.addf %290, %289 : vector<2x128xf32>
    %c17 = arith.constant 17 : index
    %292 = memref.load %arg2[%c17] : memref<116xf32, #tpu.memory_space<smem>>
    %293 = vector.broadcast %292 : f32 to vector<2x128xf32>
    %294 = arith.mulf %293, %3 : vector<2x128xf32>
    %295 = arith.addf %285, %294 : vector<2x128xf32>
    %c49 = arith.constant 49 : index
    %296 = memref.load %arg2[%c49] : memref<116xf32, #tpu.memory_space<smem>>
    %297 = vector.broadcast %296 : f32 to vector<2x128xf32>
    %298 = arith.mulf %297, %3 : vector<2x128xf32>
    %299 = arith.addf %291, %298 : vector<2x128xf32>
    %c18 = arith.constant 18 : index
    %300 = memref.load %arg2[%c18] : memref<116xf32, #tpu.memory_space<smem>>
    %301 = vector.broadcast %300 : f32 to vector<2x128xf32>
    %302 = arith.mulf %301, %5 : vector<2x128xf32>
    %303 = arith.addf %295, %302 : vector<2x128xf32>
    %c50 = arith.constant 50 : index
    %304 = memref.load %arg2[%c50] : memref<116xf32, #tpu.memory_space<smem>>
    %305 = vector.broadcast %304 : f32 to vector<2x128xf32>
    %306 = arith.mulf %305, %5 : vector<2x128xf32>
    %307 = arith.addf %299, %306 : vector<2x128xf32>
    %c19 = arith.constant 19 : index
    %308 = memref.load %arg2[%c19] : memref<116xf32, #tpu.memory_space<smem>>
    %309 = vector.broadcast %308 : f32 to vector<2x128xf32>
    %310 = arith.mulf %309, %7 : vector<2x128xf32>
    %311 = arith.addf %303, %310 : vector<2x128xf32>
    %c51 = arith.constant 51 : index
    %312 = memref.load %arg2[%c51] : memref<116xf32, #tpu.memory_space<smem>>
    %313 = vector.broadcast %312 : f32 to vector<2x128xf32>
    %314 = arith.mulf %313, %7 : vector<2x128xf32>
    %315 = arith.addf %307, %314 : vector<2x128xf32>
    %cst_75 = arith.constant -3.000000e+01 : f32
    %cst_76 = arith.constant 2.000000e+01 : f32
    %316 = vector.broadcast %cst_75 : f32 to vector<2x128xf32>
    %317 = arith.maximumf %316, %315 : vector<2x128xf32>
    %318 = vector.broadcast %cst_76 : f32 to vector<2x128xf32>
    %319 = arith.minimumf %318, %317 : vector<2x128xf32>
    %cst_77 = arith.constant 5.000000e-01 : f32
    %320 = vector.broadcast %cst_77 : f32 to vector<2x128xf32>
    %321 = arith.mulf %320, %319 : vector<2x128xf32>
    %322 = math.exp %321 : vector<2x128xf32>
    %c0_78 = arith.constant 0 : index
    %c4_79 = arith.constant 4 : index
    %c0_80 = arith.constant 0 : index
    %c0_81 = arith.constant 0 : index
    %323 = vector.load %arg4[%c0_78, %c4_79, %c0_80, %c0_81] : memref<1x8x2x128xf32, #tpu.memory_space<vmem>>, vector<1x1x2x128xf32>
    %324 = vector.shape_cast %323 : vector<1x1x2x128xf32> to vector<2x128xf32>
    %325 = arith.mulf %322, %324 : vector<2x128xf32>
    %326 = arith.addf %311, %325 : vector<2x128xf32>
    %c0_82 = arith.constant 0 : index
    %c4_83 = arith.constant 4 : index
    %c0_84 = arith.constant 0 : index
    %c0_85 = arith.constant 0 : index
    %327 = vector.load %arg6[%c0_82, %c4_83, %c0_84, %c0_85] : memref<1x8x2x128xf32, #tpu.memory_space<vmem>>, vector<1x1x2x128xf32>
    %328 = vector.shape_cast %327 : vector<1x1x2x128xf32> to vector<2x128xf32>
    %329 = vector.shape_cast %311 : vector<2x128xf32> to vector<1x1x2x128xf32>
    tpu.vector_store %arg6[%c0_82, %c4_83, %c0_84, %c0_85], %329 {strides = array<i32>} : memref<1x8x2x128xf32, #tpu.memory_space<vmem>>, vector<1x1x2x128xf32>,
    %c0_86 = arith.constant 0 : index
    %c4_87 = arith.constant 4 : index
    %c0_88 = arith.constant 0 : index
    %c0_89 = arith.constant 0 : index
    %330 = vector.load %arg7[%c0_86, %c4_87, %c0_88, %c0_89] : memref<1x8x2x128xf32, #tpu.memory_space<vmem>>, vector<1x1x2x128xf32>
    %331 = vector.shape_cast %330 : vector<1x1x2x128xf32> to vector<2x128xf32>
    %332 = vector.shape_cast %319 : vector<2x128xf32> to vector<1x1x2x128xf32>
    tpu.vector_store %arg7[%c0_86, %c4_87, %c0_88, %c0_89], %332 {strides = array<i32>} : memref<1x8x2x128xf32, #tpu.memory_space<vmem>>, vector<1x1x2x128xf32>,
    %c84 = arith.constant 84 : index
    %333 = memref.load %arg2[%c84] : memref<116xf32, #tpu.memory_space<smem>>
    %334 = vector.broadcast %333 : f32 to vector<2x128xf32>
    %335 = arith.mulf %334, %326 : vector<2x128xf32>
    %336 = arith.addf %267, %335 : vector<2x128xf32>
    %c92 = arith.constant 92 : index
    %337 = memref.load %arg2[%c92] : memref<116xf32, #tpu.memory_space<smem>>
    %338 = vector.broadcast %337 : f32 to vector<2x128xf32>
    %339 = arith.mulf %338, %326 : vector<2x128xf32>
    %340 = arith.addf %271, %339 : vector<2x128xf32>
    %c100 = arith.constant 100 : index
    %341 = memref.load %arg2[%c100] : memref<116xf32, #tpu.memory_space<smem>>
    %342 = vector.broadcast %341 : f32 to vector<2x128xf32>
    %343 = arith.mulf %342, %326 : vector<2x128xf32>
    %344 = arith.addf %275, %343 : vector<2x128xf32>
    %c108 = arith.constant 108 : index
    %345 = memref.load %arg2[%c108] : memref<116xf32, #tpu.memory_space<smem>>
    %346 = vector.broadcast %345 : f32 to vector<2x128xf32>
    %347 = arith.mulf %346, %326 : vector<2x128xf32>
    %348 = arith.addf %279, %347 : vector<2x128xf32>
    %c69 = arith.constant 69 : index
    %349 = memref.load %arg2[%c69] : memref<116xf32, #tpu.memory_space<smem>>
    %c20 = arith.constant 20 : index
    %350 = memref.load %arg2[%c20] : memref<116xf32, #tpu.memory_space<smem>>
    %351 = vector.broadcast %350 : f32 to vector<2x128xf32>
    %352 = arith.mulf %351, %1 : vector<2x128xf32>
    %353 = vector.broadcast %349 : f32 to vector<2x128xf32>
    %354 = arith.addf %353, %352 : vector<2x128xf32>
    %c77 = arith.constant 77 : index
    %355 = memref.load %arg2[%c77] : memref<116xf32, #tpu.memory_space<smem>>
    %c52 = arith.constant 52 : index
    %356 = memref.load %arg2[%c52] : memref<116xf32, #tpu.memory_space<smem>>
    %357 = vector.broadcast %356 : f32 to vector<2x128xf32>
    %358 = arith.mulf %357, %1 : vector<2x128xf32>
    %359 = vector.broadcast %355 : f32 to vector<2x128xf32>
    %360 = arith.addf %359, %358 : vector<2x128xf32>
    %c21 = arith.constant 21 : index
    %361 = memref.load %arg2[%c21] : memref<116xf32, #tpu.memory_space<smem>>
    %362 = vector.broadcast %361 : f32 to vector<2x128xf32>
    %363 = arith.mulf %362, %3 : vector<2x128xf32>
    %364 = arith.addf %354, %363 : vector<2x128xf32>
    %c53 = arith.constant 53 : index
    %365 = memref.load %arg2[%c53] : memref<116xf32, #tpu.memory_space<smem>>
    %366 = vector.broadcast %365 : f32 to vector<2x128xf32>
    %367 = arith.mulf %366, %3 : vector<2x128xf32>
    %368 = arith.addf %360, %367 : vector<2x128xf32>
    %c22 = arith.constant 22 : index
    %369 = memref.load %arg2[%c22] : memref<116xf32, #tpu.memory_space<smem>>
    %370 = vector.broadcast %369 : f32 to vector<2x128xf32>
    %371 = arith.mulf %370, %5 : vector<2x128xf32>
    %372 = arith.addf %364, %371 : vector<2x128xf32>
    %c54 = arith.constant 54 : index
    %373 = memref.load %arg2[%c54] : memref<116xf32, #tpu.memory_space<smem>>
    %374 = vector.broadcast %373 : f32 to vector<2x128xf32>
    %375 = arith.mulf %374, %5 : vector<2x128xf32>
    %376 = arith.addf %368, %375 : vector<2x128xf32>
    %c23 = arith.constant 23 : index
    %377 = memref.load %arg2[%c23] : memref<116xf32, #tpu.memory_space<smem>>
    %378 = vector.broadcast %377 : f32 to vector<2x128xf32>
    %379 = arith.mulf %378, %7 : vector<2x128xf32>
    %380 = arith.addf %372, %379 : vector<2x128xf32>
    %c55 = arith.constant 55 : index
    %381 = memref.load %arg2[%c55] : memref<116xf32, #tpu.memory_space<smem>>
    %382 = vector.broadcast %381 : f32 to vector<2x128xf32>
    %383 = arith.mulf %382, %7 : vector<2x128xf32>
    %384 = arith.addf %376, %383 : vector<2x128xf32>
    %cst_90 = arith.constant -3.000000e+01 : f32
    %cst_91 = arith.constant 2.000000e+01 : f32
    %385 = vector.broadcast %cst_90 : f32 to vector<2x128xf32>
    %386 = arith.maximumf %385, %384 : vector<2x128xf32>
    %387 = vector.broadcast %cst_91 : f32 to vector<2x128xf32>
    %388 = arith.minimumf %387, %386 : vector<2x128xf32>
    %cst_92 = arith.constant 5.000000e-01 : f32
    %389 = vector.broadcast %cst_92 : f32 to vector<2x128xf32>
    %390 = arith.mulf %389, %388 : vector<2x128xf32>
    %391 = math.exp %390 : vector<2x128xf32>
    %c0_93 = arith.constant 0 : index
    %c5_94 = arith.constant 5 : index
    %c0_95 = arith.constant 0 : index
    %c0_96 = arith.constant 0 : index
    %392 = vector.load %arg4[%c0_93, %c5_94, %c0_95, %c0_96] : memref<1x8x2x128xf32, #tpu.memory_space<vmem>>, vector<1x1x2x128xf32>
    %393 = vector.shape_cast %392 : vector<1x1x2x128xf32> to vector<2x128xf32>
    %394 = arith.mulf %391, %393 : vector<2x128xf32>
    %395 = arith.addf %380, %394 : vector<2x128xf32>
    %c0_97 = arith.constant 0 : index
    %c5_98 = arith.constant 5 : index
    %c0_99 = arith.constant 0 : index
    %c0_100 = arith.constant 0 : index
    %396 = vector.load %arg6[%c0_97, %c5_98, %c0_99, %c0_100] : memref<1x8x2x128xf32, #tpu.memory_space<vmem>>, vector<1x1x2x128xf32>
    %397 = vector.shape_cast %396 : vector<1x1x2x128xf32> to vector<2x128xf32>
    %398 = vector.shape_cast %380 : vector<2x128xf32> to vector<1x1x2x128xf32>
    tpu.vector_store %arg6[%c0_97, %c5_98, %c0_99, %c0_100], %398 {strides = array<i32>} : memref<1x8x2x128xf32, #tpu.memory_space<vmem>>, vector<1x1x2x128xf32>,
    %c0_101 = arith.constant 0 : index
    %c5_102 = arith.constant 5 : index
    %c0_103 = arith.constant 0 : index
    %c0_104 = arith.constant 0 : index
    %399 = vector.load %arg7[%c0_101, %c5_102, %c0_103, %c0_104] : memref<1x8x2x128xf32, #tpu.memory_space<vmem>>, vector<1x1x2x128xf32>
    %400 = vector.shape_cast %399 : vector<1x1x2x128xf32> to vector<2x128xf32>
    %401 = vector.shape_cast %388 : vector<2x128xf32> to vector<1x1x2x128xf32>
    tpu.vector_store %arg7[%c0_101, %c5_102, %c0_103, %c0_104], %401 {strides = array<i32>} : memref<1x8x2x128xf32, #tpu.memory_space<vmem>>, vector<1x1x2x128xf32>,
    %c85 = arith.constant 85 : index
    %402 = memref.load %arg2[%c85] : memref<116xf32, #tpu.memory_space<smem>>
    %403 = vector.broadcast %402 : f32 to vector<2x128xf32>
    %404 = arith.mulf %403, %395 : vector<2x128xf32>
    %405 = arith.addf %336, %404 : vector<2x128xf32>
    %c93 = arith.constant 93 : index
    %406 = memref.load %arg2[%c93] : memref<116xf32, #tpu.memory_space<smem>>
    %407 = vector.broadcast %406 : f32 to vector<2x128xf32>
    %408 = arith.mulf %407, %395 : vector<2x128xf32>
    %409 = arith.addf %340, %408 : vector<2x128xf32>
    %c101 = arith.constant 101 : index
    %410 = memref.load %arg2[%c101] : memref<116xf32, #tpu.memory_space<smem>>
    %411 = vector.broadcast %410 : f32 to vector<2x128xf32>
    %412 = arith.mulf %411, %395 : vector<2x128xf32>
    %413 = arith.addf %344, %412 : vector<2x128xf32>
    %c109 = arith.constant 109 : index
    %414 = memref.load %arg2[%c109] : memref<116xf32, #tpu.memory_space<smem>>
    %415 = vector.broadcast %414 : f32 to vector<2x128xf32>
    %416 = arith.mulf %415, %395 : vector<2x128xf32>
    %417 = arith.addf %348, %416 : vector<2x128xf32>
    %c70 = arith.constant 70 : index
    %418 = memref.load %arg2[%c70] : memref<116xf32, #tpu.memory_space<smem>>
    %c24 = arith.constant 24 : index
    %419 = memref.load %arg2[%c24] : memref<116xf32, #tpu.memory_space<smem>>
    %420 = vector.broadcast %419 : f32 to vector<2x128xf32>
    %421 = arith.mulf %420, %1 : vector<2x128xf32>
    %422 = vector.broadcast %418 : f32 to vector<2x128xf32>
    %423 = arith.addf %422, %421 : vector<2x128xf32>
    %c78 = arith.constant 78 : index
    %424 = memref.load %arg2[%c78] : memref<116xf32, #tpu.memory_space<smem>>
    %c56 = arith.constant 56 : index
    %425 = memref.load %arg2[%c56] : memref<116xf32, #tpu.memory_space<smem>>
    %426 = vector.broadcast %425 : f32 to vector<2x128xf32>
    %427 = arith.mulf %426, %1 : vector<2x128xf32>
    %428 = vector.broadcast %424 : f32 to vector<2x128xf32>
    %429 = arith.addf %428, %427 : vector<2x128xf32>
    %c25 = arith.constant 25 : index
    %430 = memref.load %arg2[%c25] : memref<116xf32, #tpu.memory_space<smem>>
    %431 = vector.broadcast %430 : f32 to vector<2x128xf32>
    %432 = arith.mulf %431, %3 : vector<2x128xf32>
    %433 = arith.addf %423, %432 : vector<2x128xf32>
    %c57 = arith.constant 57 : index
    %434 = memref.load %arg2[%c57] : memref<116xf32, #tpu.memory_space<smem>>
    %435 = vector.broadcast %434 : f32 to vector<2x128xf32>
    %436 = arith.mulf %435, %3 : vector<2x128xf32>
    %437 = arith.addf %429, %436 : vector<2x128xf32>
    %c26 = arith.constant 26 : index
    %438 = memref.load %arg2[%c26] : memref<116xf32, #tpu.memory_space<smem>>
    %439 = vector.broadcast %438 : f32 to vector<2x128xf32>
    %440 = arith.mulf %439, %5 : vector<2x128xf32>
    %441 = arith.addf %433, %440 : vector<2x128xf32>
    %c58 = arith.constant 58 : index
    %442 = memref.load %arg2[%c58] : memref<116xf32, #tpu.memory_space<smem>>
    %443 = vector.broadcast %442 : f32 to vector<2x128xf32>
    %444 = arith.mulf %443, %5 : vector<2x128xf32>
    %445 = arith.addf %437, %444 : vector<2x128xf32>
    %c27 = arith.constant 27 : index
    %446 = memref.load %arg2[%c27] : memref<116xf32, #tpu.memory_space<smem>>
    %447 = vector.broadcast %446 : f32 to vector<2x128xf32>
    %448 = arith.mulf %447, %7 : vector<2x128xf32>
    %449 = arith.addf %441, %448 : vector<2x128xf32>
    %c59 = arith.constant 59 : index
    %450 = memref.load %arg2[%c59] : memref<116xf32, #tpu.memory_space<smem>>
    %451 = vector.broadcast %450 : f32 to vector<2x128xf32>
    %452 = arith.mulf %451, %7 : vector<2x128xf32>
    %453 = arith.addf %445, %452 : vector<2x128xf32>
    %cst_105 = arith.constant -3.000000e+01 : f32
    %cst_106 = arith.constant 2.000000e+01 : f32
    %454 = vector.broadcast %cst_105 : f32 to vector<2x128xf32>
    %455 = arith.maximumf %454, %453 : vector<2x128xf32>
    %456 = vector.broadcast %cst_106 : f32 to vector<2x128xf32>
    %457 = arith.minimumf %456, %455 : vector<2x128xf32>
    %cst_107 = arith.constant 5.000000e-01 : f32
    %458 = vector.broadcast %cst_107 : f32 to vector<2x128xf32>
    %459 = arith.mulf %458, %457 : vector<2x128xf32>
    %460 = math.exp %459 : vector<2x128xf32>
    %c0_108 = arith.constant 0 : index
    %c6_109 = arith.constant 6 : index
    %c0_110 = arith.constant 0 : index
    %c0_111 = arith.constant 0 : index
    %461 = vector.load %arg4[%c0_108, %c6_109, %c0_110, %c0_111] : memref<1x8x2x128xf32, #tpu.memory_space<vmem>>, vector<1x1x2x128xf32>
    %462 = vector.shape_cast %461 : vector<1x1x2x128xf32> to vector<2x128xf32>
    %463 = arith.mulf %460, %462 : vector<2x128xf32>
    %464 = arith.addf %449, %463 : vector<2x128xf32>
    %c0_112 = arith.constant 0 : index
    %c6_113 = arith.constant 6 : index
    %c0_114 = arith.constant 0 : index
    %c0_115 = arith.constant 0 : index
    %465 = vector.load %arg6[%c0_112, %c6_113, %c0_114, %c0_115] : memref<1x8x2x128xf32, #tpu.memory_space<vmem>>, vector<1x1x2x128xf32>
    %466 = vector.shape_cast %465 : vector<1x1x2x128xf32> to vector<2x128xf32>
    %467 = vector.shape_cast %449 : vector<2x128xf32> to vector<1x1x2x128xf32>
    tpu.vector_store %arg6[%c0_112, %c6_113, %c0_114, %c0_115], %467 {strides = array<i32>} : memref<1x8x2x128xf32, #tpu.memory_space<vmem>>, vector<1x1x2x128xf32>,
    %c0_116 = arith.constant 0 : index
    %c6_117 = arith.constant 6 : index
    %c0_118 = arith.constant 0 : index
    %c0_119 = arith.constant 0 : index
    %468 = vector.load %arg7[%c0_116, %c6_117, %c0_118, %c0_119] : memref<1x8x2x128xf32, #tpu.memory_space<vmem>>, vector<1x1x2x128xf32>
    %469 = vector.shape_cast %468 : vector<1x1x2x128xf32> to vector<2x128xf32>
    %470 = vector.shape_cast %457 : vector<2x128xf32> to vector<1x1x2x128xf32>
    tpu.vector_store %arg7[%c0_116, %c6_117, %c0_118, %c0_119], %470 {strides = array<i32>} : memref<1x8x2x128xf32, #tpu.memory_space<vmem>>, vector<1x1x2x128xf32>,
    %c86 = arith.constant 86 : index
    %471 = memref.load %arg2[%c86] : memref<116xf32, #tpu.memory_space<smem>>
    %472 = vector.broadcast %471 : f32 to vector<2x128xf32>
    %473 = arith.mulf %472, %464 : vector<2x128xf32>
    %474 = arith.addf %405, %473 : vector<2x128xf32>
    %c94 = arith.constant 94 : index
    %475 = memref.load %arg2[%c94] : memref<116xf32, #tpu.memory_space<smem>>
    %476 = vector.broadcast %475 : f32 to vector<2x128xf32>
    %477 = arith.mulf %476, %464 : vector<2x128xf32>
    %478 = arith.addf %409, %477 : vector<2x128xf32>
    %c102 = arith.constant 102 : index
    %479 = memref.load %arg2[%c102] : memref<116xf32, #tpu.memory_space<smem>>
    %480 = vector.broadcast %479 : f32 to vector<2x128xf32>
    %481 = arith.mulf %480, %464 : vector<2x128xf32>
    %482 = arith.addf %413, %481 : vector<2x128xf32>
    %c110 = arith.constant 110 : index
    %483 = memref.load %arg2[%c110] : memref<116xf32, #tpu.memory_space<smem>>
    %484 = vector.broadcast %483 : f32 to vector<2x128xf32>
    %485 = arith.mulf %484, %464 : vector<2x128xf32>
    %486 = arith.addf %417, %485 : vector<2x128xf32>
    %c71 = arith.constant 71 : index
    %487 = memref.load %arg2[%c71] : memref<116xf32, #tpu.memory_space<smem>>
    %c28 = arith.constant 28 : index
    %488 = memref.load %arg2[%c28] : memref<116xf32, #tpu.memory_space<smem>>
    %489 = vector.broadcast %488 : f32 to vector<2x128xf32>
    %490 = arith.mulf %489, %1 : vector<2x128xf32>
    %491 = vector.broadcast %487 : f32 to vector<2x128xf32>
    %492 = arith.addf %491, %490 : vector<2x128xf32>
    %c79 = arith.constant 79 : index
    %493 = memref.load %arg2[%c79] : memref<116xf32, #tpu.memory_space<smem>>
    %c60 = arith.constant 60 : index
    %494 = memref.load %arg2[%c60] : memref<116xf32, #tpu.memory_space<smem>>
    %495 = vector.broadcast %494 : f32 to vector<2x128xf32>
    %496 = arith.mulf %495, %1 : vector<2x128xf32>
    %497 = vector.broadcast %493 : f32 to vector<2x128xf32>
    %498 = arith.addf %497, %496 : vector<2x128xf32>
    %c29 = arith.constant 29 : index
    %499 = memref.load %arg2[%c29] : memref<116xf32, #tpu.memory_space<smem>>
    %500 = vector.broadcast %499 : f32 to vector<2x128xf32>
    %501 = arith.mulf %500, %3 : vector<2x128xf32>
    %502 = arith.addf %492, %501 : vector<2x128xf32>
    %c61 = arith.constant 61 : index
    %503 = memref.load %arg2[%c61] : memref<116xf32, #tpu.memory_space<smem>>
    %504 = vector.broadcast %503 : f32 to vector<2x128xf32>
    %505 = arith.mulf %504, %3 : vector<2x128xf32>
    %506 = arith.addf %498, %505 : vector<2x128xf32>
    %c30 = arith.constant 30 : index
    %507 = memref.load %arg2[%c30] : memref<116xf32, #tpu.memory_space<smem>>
    %508 = vector.broadcast %507 : f32 to vector<2x128xf32>
    %509 = arith.mulf %508, %5 : vector<2x128xf32>
    %510 = arith.addf %502, %509 : vector<2x128xf32>
    %c62 = arith.constant 62 : index
    %511 = memref.load %arg2[%c62] : memref<116xf32, #tpu.memory_space<smem>>
    %512 = vector.broadcast %511 : f32 to vector<2x128xf32>
    %513 = arith.mulf %512, %5 : vector<2x128xf32>
    %514 = arith.addf %506, %513 : vector<2x128xf32>
    %c31 = arith.constant 31 : index
    %515 = memref.load %arg2[%c31] : memref<116xf32, #tpu.memory_space<smem>>
    %516 = vector.broadcast %515 : f32 to vector<2x128xf32>
    %517 = arith.mulf %516, %7 : vector<2x128xf32>
    %518 = arith.addf %510, %517 : vector<2x128xf32>
    %c63 = arith.constant 63 : index
    %519 = memref.load %arg2[%c63] : memref<116xf32, #tpu.memory_space<smem>>
    %520 = vector.broadcast %519 : f32 to vector<2x128xf32>
    %521 = arith.mulf %520, %7 : vector<2x128xf32>
    %522 = arith.addf %514, %521 : vector<2x128xf32>
    %cst_120 = arith.constant -3.000000e+01 : f32
    %cst_121 = arith.constant 2.000000e+01 : f32
    %523 = vector.broadcast %cst_120 : f32 to vector<2x128xf32>
    %524 = arith.maximumf %523, %522 : vector<2x128xf32>
    %525 = vector.broadcast %cst_121 : f32 to vector<2x128xf32>
    %526 = arith.minimumf %525, %524 : vector<2x128xf32>
    %cst_122 = arith.constant 5.000000e-01 : f32
    %527 = vector.broadcast %cst_122 : f32 to vector<2x128xf32>
    %528 = arith.mulf %527, %526 : vector<2x128xf32>
    %529 = math.exp %528 : vector<2x128xf32>
    %c0_123 = arith.constant 0 : index
    %c7_124 = arith.constant 7 : index
    %c0_125 = arith.constant 0 : index
    %c0_126 = arith.constant 0 : index
    %530 = vector.load %arg4[%c0_123, %c7_124, %c0_125, %c0_126] : memref<1x8x2x128xf32, #tpu.memory_space<vmem>>, vector<1x1x2x128xf32>
    %531 = vector.shape_cast %530 : vector<1x1x2x128xf32> to vector<2x128xf32>
    %532 = arith.mulf %529, %531 : vector<2x128xf32>
    %533 = arith.addf %518, %532 : vector<2x128xf32>
    %c0_127 = arith.constant 0 : index
    %c7_128 = arith.constant 7 : index
    %c0_129 = arith.constant 0 : index
    %c0_130 = arith.constant 0 : index
    %534 = vector.load %arg6[%c0_127, %c7_128, %c0_129, %c0_130] : memref<1x8x2x128xf32, #tpu.memory_space<vmem>>, vector<1x1x2x128xf32>
    %535 = vector.shape_cast %534 : vector<1x1x2x128xf32> to vector<2x128xf32>
    %536 = vector.shape_cast %518 : vector<2x128xf32> to vector<1x1x2x128xf32>
    tpu.vector_store %arg6[%c0_127, %c7_128, %c0_129, %c0_130], %536 {strides = array<i32>} : memref<1x8x2x128xf32, #tpu.memory_space<vmem>>, vector<1x1x2x128xf32>,
    %c0_131 = arith.constant 0 : index
    %c7_132 = arith.constant 7 : index
    %c0_133 = arith.constant 0 : index
    %c0_134 = arith.constant 0 : index
    %537 = vector.load %arg7[%c0_131, %c7_132, %c0_133, %c0_134] : memref<1x8x2x128xf32, #tpu.memory_space<vmem>>, vector<1x1x2x128xf32>
    %538 = vector.shape_cast %537 : vector<1x1x2x128xf32> to vector<2x128xf32>
    %539 = vector.shape_cast %526 : vector<2x128xf32> to vector<1x1x2x128xf32>
    tpu.vector_store %arg7[%c0_131, %c7_132, %c0_133, %c0_134], %539 {strides = array<i32>} : memref<1x8x2x128xf32, #tpu.memory_space<vmem>>, vector<1x1x2x128xf32>,
    %c87 = arith.constant 87 : index
    %540 = memref.load %arg2[%c87] : memref<116xf32, #tpu.memory_space<smem>>
    %541 = vector.broadcast %540 : f32 to vector<2x128xf32>
    %542 = arith.mulf %541, %533 : vector<2x128xf32>
    %543 = arith.addf %474, %542 : vector<2x128xf32>
    %c95 = arith.constant 95 : index
    %544 = memref.load %arg2[%c95] : memref<116xf32, #tpu.memory_space<smem>>
    %545 = vector.broadcast %544 : f32 to vector<2x128xf32>
    %546 = arith.mulf %545, %533 : vector<2x128xf32>
    %547 = arith.addf %478, %546 : vector<2x128xf32>
    %c103 = arith.constant 103 : index
    %548 = memref.load %arg2[%c103] : memref<116xf32, #tpu.memory_space<smem>>
    %549 = vector.broadcast %548 : f32 to vector<2x128xf32>
    %550 = arith.mulf %549, %533 : vector<2x128xf32>
    %551 = arith.addf %482, %550 : vector<2x128xf32>
    %c111 = arith.constant 111 : index
    %552 = memref.load %arg2[%c111] : memref<116xf32, #tpu.memory_space<smem>>
    %553 = vector.broadcast %552 : f32 to vector<2x128xf32>
    %554 = arith.mulf %553, %533 : vector<2x128xf32>
    %555 = arith.addf %486, %554 : vector<2x128xf32>
    %c112 = arith.constant 112 : index
    %556 = memref.load %arg2[%c112] : memref<116xf32, #tpu.memory_space<smem>>
    %557 = vector.broadcast %556 : f32 to vector<2x128xf32>
    %558 = arith.addf %543, %557 : vector<2x128xf32>
    %c0_135 = arith.constant 0 : index
    %c0_136 = arith.constant 0 : index
    %c0_137 = arith.constant 0 : index
    %c0_138 = arith.constant 0 : index
    %559 = vector.load %arg5[%c0_135, %c0_136, %c0_137, %c0_138] : memref<1x4x2x128xf32, #tpu.memory_space<vmem>>, vector<1x1x2x128xf32>
    %560 = vector.shape_cast %559 : vector<1x1x2x128xf32> to vector<2x128xf32>
    %561 = vector.shape_cast %558 : vector<2x128xf32> to vector<1x1x2x128xf32>
    tpu.vector_store %arg5[%c0_135, %c0_136, %c0_137, %c0_138], %561 {strides = array<i32>} : memref<1x4x2x128xf32, #tpu.memory_space<vmem>>, vector<1x1x2x128xf32>,
    %c113 = arith.constant 113 : index
    %562 = memref.load %arg2[%c113] : memref<116xf32, #tpu.memory_space<smem>>
    %563 = vector.broadcast %562 : f32 to vector<2x128xf32>
    %564 = arith.addf %547, %563 : vector<2x128xf32>
    %c0_139 = arith.constant 0 : index
    %c1_140 = arith.constant 1 : index
    %c0_141 = arith.constant 0 : index
    %c0_142 = arith.constant 0 : index
    %565 = vector.load %arg5[%c0_139, %c1_140, %c0_141, %c0_142] : memref<1x4x2x128xf32, #tpu.memory_space<vmem>>, vector<1x1x2x128xf32>
    %566 = vector.shape_cast %565 : vector<1x1x2x128xf32> to vector<2x128xf32>
    %567 = vector.shape_cast %564 : vector<2x128xf32> to vector<1x1x2x128xf32>
    tpu.vector_store %arg5[%c0_139, %c1_140, %c0_141, %c0_142], %567 {strides = array<i32>} : memref<1x4x2x128xf32, #tpu.memory_space<vmem>>, vector<1x1x2x128xf32>,
    %c114 = arith.constant 114 : index
    %568 = memref.load %arg2[%c114] : memref<116xf32, #tpu.memory_space<smem>>
    %569 = vector.broadcast %568 : f32 to vector<2x128xf32>
    %570 = arith.addf %551, %569 : vector<2x128xf32>
    %c0_143 = arith.constant 0 : index
    %c2_144 = arith.constant 2 : index
    %c0_145 = arith.constant 0 : index
    %c0_146 = arith.constant 0 : index
    %571 = vector.load %arg5[%c0_143, %c2_144, %c0_145, %c0_146] : memref<1x4x2x128xf32, #tpu.memory_space<vmem>>, vector<1x1x2x128xf32>
    %572 = vector.shape_cast %571 : vector<1x1x2x128xf32> to vector<2x128xf32>
    %573 = vector.shape_cast %570 : vector<2x128xf32> to vector<1x1x2x128xf32>
    tpu.vector_store %arg5[%c0_143, %c2_144, %c0_145, %c0_146], %573 {strides = array<i32>} : memref<1x4x2x128xf32, #tpu.memory_space<vmem>>, vector<1x1x2x128xf32>,
    %c115 = arith.constant 115 : index
    %574 = memref.load %arg2[%c115] : memref<116xf32, #tpu.memory_space<smem>>
    %575 = vector.broadcast %574 : f32 to vector<2x128xf32>
    %576 = arith.addf %555, %575 : vector<2x128xf32>
    %c0_147 = arith.constant 0 : index
    %c3_148 = arith.constant 3 : index
    %c0_149 = arith.constant 0 : index
    %c0_150 = arith.constant 0 : index
    %577 = vector.load %arg5[%c0_147, %c3_148, %c0_149, %c0_150] : memref<1x4x2x128xf32, #tpu.memory_space<vmem>>, vector<1x1x2x128xf32>
    %578 = vector.shape_cast %577 : vector<1x1x2x128xf32> to vector<2x128xf32>
    %579 = vector.shape_cast %576 : vector<2x128xf32> to vector<1x1x2x128xf32>
    tpu.vector_store %arg5[%c0_147, %c3_148, %c0_149, %c0_150], %579 {strides = array<i32>} : memref<1x4x2x128xf32, #tpu.memory_space<vmem>>, vector<1x1x2x128xf32>,
    return
  }
  func.func @transform_0(%arg0: i32, %arg1: i32) -> i32 {
    %c0_i32 = arith.constant 0 : i32
    %c0_i32_0 = arith.constant 0 : i32
    return %c0_i32 : i32
  }
  func.func @transform_1(%arg0: i32, %arg1: i32) -> (i32, i32, i32, i32) {
    %c0_i32 = arith.constant 0 : i32
    %c0_i32_0 = arith.constant 0 : i32
    %c0_i32_1 = arith.constant 0 : i32
    return %arg0, %c0_i32, %arg1, %c0_i32_0 : i32, i32, i32, i32
  }
  func.func @transform_2(%arg0: i32, %arg1: i32) -> (i32, i32, i32, i32) {
    %c0_i32 = arith.constant 0 : i32
    %c0_i32_0 = arith.constant 0 : i32
    %c0_i32_1 = arith.constant 0 : i32
    return %arg0, %c0_i32, %arg1, %c0_i32_0 : i32, i32, i32, i32
  }
  func.func @transform_3(%arg0: i32, %arg1: i32) -> (i32, i32, i32, i32) {
    %c0_i32 = arith.constant 0 : i32
    %c0_i32_0 = arith.constant 0 : i32
    %c0_i32_1 = arith.constant 0 : i32
    return %arg0, %c0_i32, %arg1, %c0_i32_0 : i32, i32, i32, i32
  }
  func.func @transform_4(%arg0: i32, %arg1: i32) -> (i32, i32, i32, i32) {
    %c0_i32 = arith.constant 0 : i32
    %c0_i32_0 = arith.constant 0 : i32
    %c0_i32_1 = arith.constant 0 : i32
    return %arg0, %c0_i32, %arg1, %c0_i32_0 : i32, i32, i32, i32
  }
  func.func @transform_5(%arg0: i32, %arg1: i32) -> (i32, i32, i32, i32) {
    %c0_i32 = arith.constant 0 : i32
    %c0_i32_0 = arith.constant 0 : i32
    %c0_i32_1 = arith.constant 0 : i32
    return %arg0, %c0_i32, %arg1, %c0_i32_0 : i32, i32, i32, i32
  }
}

</mosaic_0001>

<llo_original>
// kernel: tpu_custom_call.1
$region0: #{tpu_custom_call.1}
  #allocation0 [shape = 'u32[]', space=smem, size = 0x4, offset = 0x4, fixed_abs, tag = 'smem constant byte address 0x4 - core index']
  #allocation1 [shape = 'u32[144,128]{1,0:T(1,128)}', space=vmem, size = 0x12000, scoped, tag = 'internal scratch']
  %s0 = inlined_call_operand.hbm [shape: f32[116], index: 0, kind: input, shape index: {}]
  %s1 = inlined_call_operand.hbm [shape: f32[2,4,2,128], index: 1, kind: input, shape index: {}]
  %s2 = inlined_call_operand.hbm [shape: f32[2,8,2,128], index: 2, kind: input, shape index: {}]
  %s3 = inlined_call_operand.hbm [shape: f32[2,4,2,128], index: 3, kind: output, shape index: {0}]
  %s4 = inlined_call_operand.hbm [shape: f32[2,8,2,128], index: 4, kind: output, shape index: {1}]
  %s5 = inlined_call_operand.hbm [shape: f32[2,8,2,128], index: 5, kind: output, shape index: {2}]
  %6 = xla_tuple %s3, %s4, %s5
  %s7 = sld [smem:[#allocation0]]
  $region73: #{tpu_custom_call.1} parent=0
    _
  %s9 = ssub.s32 1, %s7
  %s10 = scalar_select 0, %s9, %s7
  $region1: #{tpu_custom_call.1} parent=0
    #allocation2 [shape = 'u8[512]{0}', space=smem, size = 0x200, scoped, tag = 'input window, operand 0, single buffered']
    #allocation3 [shape = 's32[2]{0}', space=sflag, size = 0x8, scoped, tag = 'scoped memory for tpu_custom_call.1']
    #allocation4 [shape = 's32[2]{0}', space=sflag, size = 0x8, scoped, tag = 'scoped memory for tpu_custom_call.1']
    #allocation5 [shape = 's32[2]{0}', space=sflag, size = 0x8, scoped, tag = 'scoped memory for tpu_custom_call.1']
    #allocation6 [shape = 'u8[8192]{0}', space=vmem, size = 0x2000, scoped, tag = 'input window, operand 1']
    #allocation7 [shape = 'u8[16384]{0}', space=vmem, size = 0x4000, scoped, tag = 'input window, operand 2']
    #allocation8 [shape = 's32[2]{0}', space=sflag, size = 0x8, scoped, tag = 'scoped memory for tpu_custom_call.1']
    #allocation9 [shape = 'u8[8192]{0}', space=vmem, size = 0x2000, scoped, tag = 'output window, operand 0']
    #allocation10 [shape = 'u8[16384]{0}', space=vmem, size = 0x4000, scoped, tag = 'output window, operand 1']
    #allocation11 [shape = 's32[2]{0}', space=sflag, size = 0x8, scoped, tag = 'scoped memory for tpu_custom_call.1']
    #allocation12 [shape = 'u8[16384]{0}', space=vmem, size = 0x4000, scoped, tag = 'output window, operand 2']
    %11 = vsyncpa [#allocation5], 0
    %12 = vsyncpa [#allocation3], 0
    %s13 = scalar_lea.sflag [#allocation3], 1
    %14 = vsyncpa %s13, 0
    %15 = vsyncpa [#allocation8], 0
    %s16 = scalar_lea.sflag [#allocation8], 1
    %17 = vsyncpa %s16, 0
    %18 = vsyncpa [#allocation4], 0
    %s19 = scalar_lea.sflag [#allocation4], 1
    %20 = vsyncpa %s19, 0
    %21 = vsyncpa [#allocation11], 0
    %s22 = scalar_lea.sflag [#allocation11], 1
    %23 = vsyncpa %s22, 0
    loop: start=0, step=1, limit=4
    $region2: #{tpu_custom_call.1} parent=1 // loop_pre_header
      _
    $region3: #{tpu_custom_call.1} parent=1 // loop_header
      %s25 = sphi 0, %s29
      %p26 = scmp.ge.s32.totalorder %s25, 4
      %s32 = sphi 0, %s44
      %s33 = sphi 0, %s40
      %s34 = sphi 0, %s32
      %s35 = sphi 0, %s33
      %s36 = sphi 0, %s34
      %s37 = sphi 0, %s35
      %s45 = sphi 0, %s45
      %s47 = sphi 0, %s45
      %s48 = sphi 0, %s47
      %s62 = sphi 0, %s48
      %s70 = sphi 0, %s72
      %s73 = sphi 0, %s70
      %s74 = sphi 0, %s73
      %s90 = sphi 0, %s74
      %s98 = sphi 0, %s100
      %s101 = sphi 0, %s98
      %s102 = sphi 0, %s101
      %s118 = sphi 0, %s102
      %s126 = sphi 0, %s128
      %s129 = sphi 0, %s126
      %s130 = sphi 0, %s129
      %s146 = sphi 0, %s130
      %s154 = sphi 0, %s156
      %s157 = sphi 0, %s154
      %s158 = sphi 0, %s157
      %s174 = sphi 0, %s158
      %s182 = sphi 0, %s184
      %s185 = sphi 0, %s182
      %s186 = sphi 0, %s185
      %s202 = sphi 0, %s186
    $region4: #{tpu_custom_call.1} parent=1 // loop_header_branch
      %28 = sbr.rel (%p26) target = $region8
    $region5: #{tpu_custom_call.1} parent=1 // loop_body
      %s30 = ssub.s32 %s25, 1
      %s31 = ssub.s32 %s25, 2
      %s38 = sadd.s32 1, %s33
      %p39 = scmp.ge.s32.totalorder %s38, 1
      %s40 = scalar_select %p39, 0, %s38
      %s41 = sadd.s32 1, %s32
      %s42 = scalar_select %p39, %s41, %s32
      %p43 = scmp.ge.s32.totalorder %s42, 2
      %s44 = scalar_select %p43, 0, %s42
      %s46 = sadd.s32 %s45, 1
      %p49 = scmp.eq.s32.totalorder %s25, 1
      %p50 = scmp.ne.s32.totalorder %s45, %s47
      %p51 = scmp.eq.s32.totalorder %s25, 0
      %p52 = por %p50, %p51
      %p53 = scmp.ne.s32.totalorder %s45, %s47
      %p54 = scmp.eq.s32.totalorder %s30, 1
      %p55 = por %p53, %p54
      %p56 = scmp.ne.s32.totalorder %s47, %s48
      %p57 = scmp.eq.s32.totalorder %s30, 0
      %p58 = por %p56, %p57
      %p59 = scmp.ne.s32.totalorder %s47, %s48
      %p60 = scmp.eq.s32.totalorder %s31, 1
      %p61 = por %p59, %p60
      %p63 = scmp.ne.s32.totalorder %s48, %s62
      %p64 = scmp.eq.s32.totalorder %s31, 0
      %p65 = por %p63, %p64
      %s66 = ssub.s32 %s32, %s44
      %s67 = ssub.s32 %s33, %s40
      %s68 = sor.u32 %s66, %s67
      %p69 = scmp.eq.s32.totalorder %s68, 0
      %s71 = sadd.s32 %s70, 1
      %s72 = scalar_select %p69, %s70, %s71
      %p75 = pneg %p69
      %p76 = scmp.eq.s32.totalorder %s25, 1
      %p77 = por %p75, %p76
      %p78 = scmp.ne.s32.totalorder %s70, %s73
      %p79 = scmp.eq.s32.totalorder %s25, 0
      %p80 = por %p78, %p79
      %p81 = scmp.ne.s32.totalorder %s70, %s73
      %p82 = scmp.eq.s32.totalorder %s30, 1
      %p83 = por %p81, %p82
      %p84 = scmp.ne.s32.totalorder %s73, %s74
      %p85 = scmp.eq.s32.totalorder %s30, 0
      %p86 = por %p84, %p85
      %p87 = scmp.ne.s32.totalorder %s73, %s74
      %p88 = scmp.eq.s32.totalorder %s31, 1
      %p89 = por %p87, %p88
      %p91 = scmp.ne.s32.totalorder %s74, %s90
      %p92 = scmp.eq.s32.totalorder %s31, 0
      %p93 = por %p91, %p92
      %s94 = ssub.s32 %s32, %s44
      %s95 = ssub.s32 %s33, %s40
      %s96 = sor.u32 %s94, %s95
      %p97 = scmp.eq.s32.totalorder %s96, 0
      %s99 = sadd.s32 %s98, 1
      %s100 = scalar_select %p97, %s98, %s99
      %p103 = pneg %p97
      %p104 = scmp.eq.s32.totalorder %s25, 1
      %p105 = por %p103, %p104
      %p106 = scmp.ne.s32.totalorder %s98, %s101
      %p107 = scmp.eq.s32.totalorder %s25, 0
      %p108 = por %p106, %p107
      %p109 = scmp.ne.s32.totalorder %s98, %s101
      %p110 = scmp.eq.s32.totalorder %s30, 1
      %p111 = por %p109, %p110
      %p112 = scmp.ne.s32.totalorder %s101, %s102
      %p113 = scmp.eq.s32.totalorder %s30, 0
      %p114 = por %p112, %p113
      %p115 = scmp.ne.s32.totalorder %s101, %s102
      %p116 = scmp.eq.s32.totalorder %s31, 1
      %p117 = por %p115, %p116
      %p119 = scmp.ne.s32.totalorder %s102, %s118
      %p120 = scmp.eq.s32.totalorder %s31, 0
      %p121 = por %p119, %p120
      %s122 = ssub.s32 %s32, %s44
      %s123 = ssub.s32 %s33, %s40
      %s124 = sor.u32 %s122, %s123
      %p125 = scmp.eq.s32.totalorder %s124, 0
      %s127 = sadd.s32 %s126, 1
      %s128 = scalar_select %p125, %s126, %s127
      %p131 = pneg %p125
      %p132 = scmp.eq.s32.totalorder %s25, 1
      %p133 = por %p131, %p132
      %p134 = scmp.ne.s32.totalorder %s126, %s129
      %p135 = scmp.eq.s32.totalorder %s25, 0
      %p136 = por %p134, %p135
      %p137 = scmp.ne.s32.totalorder %s126, %s129
      %p138 = scmp.eq.s32.totalorder %s30, 1
      %p139 = por %p137, %p138
      %p140 = scmp.ne.s32.totalorder %s129, %s130
      %p141 = scmp.eq.s32.totalorder %s30, 0
      %p142 = por %p140, %p141
      %p143 = scmp.ne.s32.totalorder %s129, %s130
      %p144 = scmp.eq.s32.totalorder %s31, 1
      %p145 = por %p143, %p144
      %p147 = scmp.ne.s32.totalorder %s130, %s146
      %p148 = scmp.eq.s32.totalorder %s31, 0
      %p149 = por %p147, %p148
      %s150 = ssub.s32 %s32, %s44
      %s151 = ssub.s32 %s33, %s40
      %s152 = sor.u32 %s150, %s151
      %p153 = scmp.eq.s32.totalorder %s152, 0
      %s155 = sadd.s32 %s154, 1
      %s156 = scalar_select %p153, %s154, %s155
      %p159 = pneg %p153
      %p160 = scmp.eq.s32.totalorder %s25, 1
      %p161 = por %p159, %p160
      %p162 = scmp.ne.s32.totalorder %s154, %s157
      %p163 = scmp.eq.s32.totalorder %s25, 0
      %p164 = por %p162, %p163
      %p165 = scmp.ne.s32.totalorder %s154, %s157
      %p166 = scmp.eq.s32.totalorder %s30, 1
      %p167 = por %p165, %p166
      %p168 = scmp.ne.s32.totalorder %s157, %s158
      %p169 = scmp.eq.s32.totalorder %s30, 0
      %p170 = por %p168, %p169
      %p171 = scmp.ne.s32.totalorder %s157, %s158
      %p172 = scmp.eq.s32.totalorder %s31, 1
      %p173 = por %p171, %p172
      %p175 = scmp.ne.s32.totalorder %s158, %s174
      %p176 = scmp.eq.s32.totalorder %s31, 0
      %p177 = por %p175, %p176
      %s178 = ssub.s32 %s32, %s44
      %s179 = ssub.s32 %s33, %s40
      %s180 = sor.u32 %s178, %s179
      %p181 = scmp.eq.s32.totalorder %s180, 0
      %s183 = sadd.s32 %s182, 1
      %s184 = scalar_select %p181, %s182, %s183
      %p187 = pneg %p181
      %p188 = scmp.eq.s32.totalorder %s25, 1
      %p189 = por %p187, %p188
      %p190 = scmp.ne.s32.totalorder %s182, %s185
      %p191 = scmp.eq.s32.totalorder %s25, 0
      %p192 = por %p190, %p191
      %p193 = scmp.ne.s32.totalorder %s182, %s185
      %p194 = scmp.eq.s32.totalorder %s30, 1
      %p195 = por %p193, %p194
      %p196 = scmp.ne.s32.totalorder %s185, %s186
      %p197 = scmp.eq.s32.totalorder %s30, 0
      %p198 = por %p196, %p197
      %p199 = scmp.ne.s32.totalorder %s185, %s186
      %p200 = scmp.eq.s32.totalorder %s31, 1
      %p201 = por %p199, %p200
      %p203 = scmp.ne.s32.totalorder %s186, %s202
      %p204 = scmp.eq.s32.totalorder %s31, 0
      %p205 = por %p203, %p204
      %p206 = scmp.le.s32.totalorder 1, %s25
      %p207 = scmp.lt.s32.totalorder %s25, 3
      %p208 = pnand %p206, %p207
      %p209 = pneg %p208
      // Predicated region
      $region9: #{tpu_custom_call.1} parent=5 // pred_check
        _
      $region10: #{tpu_custom_call.1} parent=5 // pred_check_branch
        %211 = sbr.rel (%p208) target = $region12
      $region11: #{tpu_custom_call.1} parent=5 // pred_region
        %s212 = ssub.s32 %s25, 1
        // Predicated region
        $region13: #{tpu_custom_call.1} parent=11 // pred_check
          %p213 = pneg %p58
        $region14: #{tpu_custom_call.1} parent=11 // pred_check_branch
          %215 = sbr.rel (%p213) target = $region16
        $region15: #{tpu_custom_call.1} parent=11 // pred_region
          %s217 = ssub.s32 16, 16
          %218 = vsyncadd [#allocation5], %s217
          %221 = dma.hbm_to_smem %s0, 16, [#allocation2], [#allocation5]
        $region16: #{tpu_custom_call.1} parent=11 // pred_fallthru
          _
      $region12: #{tpu_custom_call.1} parent=5 // pred_fallthru
        _
      %p222 = scmp.lt.s32.totalorder %s25, 2
      // Predicated region
      $region17: #{tpu_custom_call.1} parent=5 // pred_check
        %p223 = pneg %p222
      $region18: #{tpu_custom_call.1} parent=5 // pred_check_branch
        %225 = sbr.rel (%p223) target = $region20
      $region19: #{tpu_custom_call.1} parent=5 // pred_region
        // Predicated region
        $region21: #{tpu_custom_call.1} parent=19 // pred_check
          %p226 = pneg %p80
        $region22: #{tpu_custom_call.1} parent=19 // pred_check_branch
          %228 = sbr.rel (%p226) target = $region24
        $region23: #{tpu_custom_call.1} parent=19 // pred_region
          %s229 = sand.u32 %s70, 1
          %s230 = scalar_lea.sflag [#allocation3], %s229
          %s231 = sand.u32 %s70, 1
          %s232 = smul.addr %s231, 8
          %s233 = scalar_lea.vmem [#allocation6], %s232
          %s235 = ssub.s32 128, 128
          %236 = vsyncadd %s230, %s235
          %s237 = smul.addr %s32, 4
          %s238 = sadd.s32 %s33, %s237
          %s239 = smul.addr %s238, 32
          %s240 = scalar_lea.hbm %s1, %s239
          %s241 = sshll.u32 %s233, 4
          %s242 = int_to_ptr.vmem [resolvable:$true] %s241
          %247 = dma.hbm_to_vmem [thread:$0]  %s240, 128, %s242, %s230, 32, 32, 2
        $region24: #{tpu_custom_call.1} parent=19 // pred_fallthru
          _
        // Predicated region
        $region25: #{tpu_custom_call.1} parent=19 // pred_check
          %p248 = pneg %p108
        $region26: #{tpu_custom_call.1} parent=19 // pred_check_branch
          %250 = sbr.rel (%p248) target = $region28
        $region27: #{tpu_custom_call.1} parent=19 // pred_region
          %s251 = sand.u32 %s98, 1
          %s252 = scalar_lea.sflag [#allocation8], %s251
          %s253 = sand.u32 %s98, 1
          %s254 = smul.addr %s253, 16
          %s255 = scalar_lea.vmem [#allocation7], %s254
          %s257 = ssub.s32 256, 256
          %258 = vsyncadd %s252, %s257
          %s259 = smul.addr %s32, 8
          %s260 = sadd.s32 %s33, %s259
          %s261 = smul.addr %s260, 32
          %s262 = scalar_lea.hbm %s2, %s261
          %s263 = sshll.u32 %s255, 4
          %s264 = int_to_ptr.vmem [resolvable:$true] %s263
          %269 = dma.hbm_to_vmem [thread:$0]  %s262, 256, %s264, %s252, 32, 32, 2
        $region28: #{tpu_custom_call.1} parent=19 // pred_fallthru
          _
      $region20: #{tpu_custom_call.1} parent=5 // pred_fallthru
        _
      %p270 = scmp.le.s32.totalorder 1, %s25
      %p271 = scmp.lt.s32.totalorder %s25, 3
      %p272 = pnand %p270, %p271
      %p273 = pneg %p272
      // Predicated region
      $region29: #{tpu_custom_call.1} parent=5 // pred_check
        _
      $region30: #{tpu_custom_call.1} parent=5 // pred_check_branch
        %275 = sbr.rel (%p272) target = $region32
      $region31: #{tpu_custom_call.1} parent=5 // pred_region
        %s276 = ssub.s32 %s25, 1
        // Predicated region
        $region33: #{tpu_custom_call.1} parent=31 // pred_check
          %p277 = pneg %p58
        $region34: #{tpu_custom_call.1} parent=31 // pred_check_branch
          %279 = sbr.rel (%p277) target = $region36
        $region35: #{tpu_custom_call.1} parent=31 // pred_region
          %280 = dma.done [#allocation5], 16
        $region36: #{tpu_custom_call.1} parent=31 // pred_fallthru
          _
        %s281 = sand.u32 %s73, 1
        %s282 = scalar_lea.sflag [#allocation3], %s281
        %s283 = sand.u32 %s73, 1
        %s284 = smul.addr %s283, 8
        %s285 = scalar_lea.vmem [#allocation6], %s284
        // Predicated region
        $region37: #{tpu_custom_call.1} parent=31 // pred_check
          %p286 = pneg %p86
        $region38: #{tpu_custom_call.1} parent=31 // pred_check_branch
          %288 = sbr.rel (%p286) target = $region40
        $region39: #{tpu_custom_call.1} parent=31 // pred_region
          %289 = dma.done %s282, 128
        $region40: #{tpu_custom_call.1} parent=31 // pred_fallthru
          _
        %s290 = sand.u32 %s101, 1
        %s291 = scalar_lea.sflag [#allocation8], %s290
        %s292 = sand.u32 %s101, 1
        %s293 = smul.addr %s292, 16
        %s294 = scalar_lea.vmem [#allocation7], %s293
        // Predicated region
        $region41: #{tpu_custom_call.1} parent=31 // pred_check
          %p295 = pneg %p114
        $region42: #{tpu_custom_call.1} parent=31 // pred_check_branch
          %297 = sbr.rel (%p295) target = $region44
        $region43: #{tpu_custom_call.1} parent=31 // pred_region
          %298 = dma.done %s291, 256
        $region44: #{tpu_custom_call.1} parent=31 // pred_fallthru
          _
        %299 = sfence
        %p300 = pneg %p58
        %p301 = pneg %p55
        %s302 = sand.u32 %s73, 1
        %s303 = scalar_lea.sflag [#allocation3], %s302
        %s304 = sand.u32 %s73, 1
        %s305 = smul.addr %s304, 8
        %s306 = scalar_lea.vmem [#allocation6], %s305
        %p307 = pneg %p86
        %p308 = pneg %p83
        %s309 = sand.u32 %s101, 1
        %s310 = scalar_lea.sflag [#allocation8], %s309
        %s311 = sand.u32 %s101, 1
        %s312 = smul.addr %s311, 16
        %s313 = scalar_lea.vmem [#allocation7], %s312
        %p314 = pneg %p114
        %p315 = pneg %p111
        %p316 = pneg %p142
        %p317 = pneg %p139
        %s318 = sand.u32 %s129, 1
        %s319 = scalar_lea.sflag [#allocation4], %s318
        %s320 = sand.u32 %s129, 1
        %s321 = smul.addr %s320, 8
        %s322 = scalar_lea.vmem [#allocation9], %s321
        %p323 = pneg %p170
        %p324 = pneg %p167
        %s325 = sand.u32 %s30, 1
        %s326 = scalar_lea.sflag [#allocation11], %s325
        %s327 = sand.u32 %s157, 1
        %s328 = smul.addr %s327, 16
        %s329 = scalar_lea.vmem [#allocation10], %s328
        %p330 = pneg %p198
        %p331 = pneg %p195
        %s332 = sand.u32 %s30, 1
        %s333 = scalar_lea.sflag [#allocation11], %s332
        %s334 = sand.u32 %s185, 1
        %s335 = smul.addr %s334, 16
        %s336 = scalar_lea.vmem [#allocation12], %s335
        %v337 = vld [vmem:[%s285] sm:$0x3]
        %s338 = scalar_lea.vmem %s285, 2 [#allocation6]
        %v339 = vld [vmem:[%s338] sm:$0x3]
        %s340 = scalar_lea.vmem %s285, 4 [#allocation6]
        %v341 = vld [vmem:[%s340] sm:$0x3]
        %s342 = scalar_lea.vmem %s285, 6 [#allocation6]
        %v343 = vld [vmem:[%s342] sm:$0x3]
        %s344 = sld [smem:[#allocation2 + $0x40]]
        %s345 = sld [smem:[#allocation2]]
        %v346 = vstv %s345
        %v347 = vmul.f32 %v346, %v337
        %v348 = vstv %s344
        %v349 = vadd.f32 %v348, %v347
        %s350 = sld [smem:[#allocation2 + $0x48]]
        %s351 = sld [smem:[#allocation2 + $0x20]]
        %v352 = vstv %s351
        %v353 = vmul.f32 %v352, %v337
        %v354 = vstv %s350
        %v355 = vadd.f32 %v354, %v353
        %s356 = sld [smem:[#allocation2 + $0x1]]
        %v357 = vstv %s356
        %v358 = vmul.f32 %v357, %v339
        %v359 = vadd.f32 %v349, %v358
        %s360 = sld [smem:[#allocation2 + $0x21]]
        %v361 = vstv %s360
        %v362 = vmul.f32 %v361, %v339
        %v363 = vadd.f32 %v355, %v362
        %s364 = sld [smem:[#allocation2 + $0x2]]
        %v365 = vstv %s364
        %v366 = vmul.f32 %v365, %v341
        %v367 = vadd.f32 %v359, %v366
        %s368 = sld [smem:[#allocation2 + $0x22]]
        %v369 = vstv %s368
        %v370 = vmul.f32 %v369, %v341
        %v371 = vadd.f32 %v363, %v370
        %s372 = sld [smem:[#allocation2 + $0x3]]
        %v373 = vstv %s372
        %v374 = vmul.f32 %v373, %v343
        %v375 = vadd.f32 %v367, %v374
        %s376 = sld [smem:[#allocation2 + $0x23]]
        %v377 = vstv %s376
        %v378 = vmul.f32 %v377, %v343
        %v379 = vadd.f32 %v371, %v378
        %v380 = vmax.f32 %v379, -30.0
        %v381 = vmin.f32 %v380, 20.0
        %v382 = vmul.f32 %v381, 0.5
        %v383 = vmul.f32 %v382, 1.442695
        %v384 = vpow.pop %v383
        %v385 = vld [vmem:[%s294] sm:$0x3]
        %v386 = vmul.f32 %v384, %v385
        %v387 = vadd.f32 %v375, %v386
        %388 = vst [vmem:[%s329] sm:$0x3] %v375
        %389 = vst [vmem:[%s336] sm:$0x3] %v381
        %s390 = sld [smem:[#allocation2 + $0x50]]
        %v391 = vstv %s390
        %v392 = vmul.f32 %v391, %v387
        %s393 = sld [smem:[#allocation2 + $0x58]]
        %v394 = vstv %s393
        %v395 = vmul.f32 %v394, %v387
        %s396 = sld [smem:[#allocation2 + $0x60]]
        %v397 = vstv %s396
        %v398 = vmul.f32 %v397, %v387
        %s399 = sld [smem:[#allocation2 + $0x68]]
        %v400 = vstv %s399
        %v401 = vmul.f32 %v400, %v387
        %s402 = sld [smem:[#allocation2 + $0x41]]
        %s403 = sld [smem:[#allocation2 + $0x4]]
        %v404 = vstv %s403
        %v405 = vmul.f32 %v404, %v337
        %v406 = vstv %s402
        %v407 = vadd.f32 %v406, %v405
        %s408 = sld [smem:[#allocation2 + $0x49]]
        %s409 = sld [smem:[#allocation2 + $0x24]]
        %v410 = vstv %s409
        %v411 = vmul.f32 %v410, %v337
        %v412 = vstv %s408
        %v413 = vadd.f32 %v412, %v411
        %s414 = sld [smem:[#allocation2 + $0x5]]
        %v415 = vstv %s414
        %v416 = vmul.f32 %v415, %v339
        %v417 = vadd.f32 %v407, %v416
        %s418 = sld [smem:[#allocation2 + $0x25]]
        %v419 = vstv %s418
        %v420 = vmul.f32 %v419, %v339
        %v421 = vadd.f32 %v413, %v420
        %s422 = sld [smem:[#allocation2 + $0x6]]
        %v423 = vstv %s422
        %v424 = vmul.f32 %v423, %v341
        %v425 = vadd.f32 %v417, %v424
        %s426 = sld [smem:[#allocation2 + $0x26]]
        %v427 = vstv %s426
        %v428 = vmul.f32 %v427, %v341
        %v429 = vadd.f32 %v421, %v428
        %s430 = sld [smem:[#allocation2 + $0x7]]
        %v431 = vstv %s430
        %v432 = vmul.f32 %v431, %v343
        %v433 = vadd.f32 %v425, %v432
        %s434 = sld [smem:[#allocation2 + $0x27]]
        %v435 = vstv %s434
        %v436 = vmul.f32 %v435, %v343
        %v437 = vadd.f32 %v429, %v436
        %v438 = vmax.f32 %v437, -30.0
        %v439 = vmin.f32 %v438, 20.0
        %v440 = vmul.f32 %v439, 0.5
        %v441 = vmul.f32 %v440, 1.442695
        %v442 = vpow.pop %v441
        %s443 = scalar_lea.vmem %s294, 2 [#allocation7]
        %v444 = vld [vmem:[%s443] sm:$0x3]
        %v445 = vmul.f32 %v442, %v444
        %v446 = vadd.f32 %v433, %v445
        %s447 = scalar_lea.vmem %s329, 2 [#allocation10]
        %448 = vst [vmem:[%s447] sm:$0x3] %v433
        %s449 = scalar_lea.vmem %s336, 2 [#allocation12]
        %450 = vst [vmem:[%s449] sm:$0x3] %v439
        %s451 = sld [smem:[#allocation2 + $0x51]]
        %v452 = vstv %s451
        %v453 = vmul.f32 %v452, %v446
        %v454 = vadd.f32 %v392, %v453
        %s455 = sld [smem:[#allocation2 + $0x59]]
        %v456 = vstv %s455
        %v457 = vmul.f32 %v456, %v446
        %v458 = vadd.f32 %v395, %v457
        %s459 = sld [smem:[#allocation2 + $0x61]]
        %v460 = vstv %s459
        %v461 = vmul.f32 %v460, %v446
        %v462 = vadd.f32 %v398, %v461
        %s463 = sld [smem:[#allocation2 + $0x69]]
        %v464 = vstv %s463
        %v465 = vmul.f32 %v464, %v446
        %v466 = vadd.f32 %v401, %v465
        %s467 = sld [smem:[#allocation2 + $0x42]]
        %s468 = sld [smem:[#allocation2 + $0x8]]
        %v469 = vstv %s468
        %v470 = vmul.f32 %v469, %v337
        %v471 = vstv %s467
        %v472 = vadd.f32 %v471, %v470
        %s473 = sld [smem:[#allocation2 + $0x4a]]
        %s474 = sld [smem:[#allocation2 + $0x28]]
        %v475 = vstv %s474
        %v476 = vmul.f32 %v475, %v337
        %v477 = vstv %s473
        %v478 = vadd.f32 %v477, %v476
        %s479 = sld [smem:[#allocation2 + $0x9]]
        %v480 = vstv %s479
        %v481 = vmul.f32 %v480, %v339
        %v482 = vadd.f32 %v472, %v481
        %s483 = sld [smem:[#allocation2 + $0x29]]
        %v484 = vstv %s483
        %v485 = vmul.f32 %v484, %v339
        %v486 = vadd.f32 %v478, %v485
        %s487 = sld [smem:[#allocation2 + $0xa]]
        %v488 = vstv %s487
        %v489 = vmul.f32 %v488, %v341
        %v490 = vadd.f32 %v482, %v489
        %s491 = sld [smem:[#allocation2 + $0x2a]]
        %v492 = vstv %s491
        %v493 = vmul.f32 %v492, %v341
        %v494 = vadd.f32 %v486, %v493
        %s495 = sld [smem:[#allocation2 + $0xb]]
        %v496 = vstv %s495
        %v497 = vmul.f32 %v496, %v343
        %v498 = vadd.f32 %v490, %v497
        %s499 = sld [smem:[#allocation2 + $0x2b]]
        %v500 = vstv %s499
        %v501 = vmul.f32 %v500, %v343
        %v502 = vadd.f32 %v494, %v501
        %v503 = vmax.f32 %v502, -30.0
        %v504 = vmin.f32 %v503, 20.0
        %v505 = vmul.f32 %v504, 0.5
        %v506 = vmul.f32 %v505, 1.442695
        %v507 = vpow.pop %v506
        %s508 = scalar_lea.vmem %s294, 4 [#allocation7]
        %v509 = vld [vmem:[%s508] sm:$0x3]
        %v510 = vmul.f32 %v507, %v509
        %v511 = vadd.f32 %v498, %v510
        %s512 = scalar_lea.vmem %s329, 4 [#allocation10]
        %513 = vst [vmem:[%s512] sm:$0x3] %v498
        %s514 = scalar_lea.vmem %s336, 4 [#allocation12]
        %515 = vst [vmem:[%s514] sm:$0x3] %v504
        %s516 = sld [smem:[#allocation2 + $0x52]]
        %v517 = vstv %s516
        %v518 = vmul.f32 %v517, %v511
        %v519 = vadd.f32 %v454, %v518
        %s520 = sld [smem:[#allocation2 + $0x5a]]
        %v521 = vstv %s520
        %v522 = vmul.f32 %v521, %v511
        %v523 = vadd.f32 %v458, %v522
        %s524 = sld [smem:[#allocation2 + $0x62]]
        %v525 = vstv %s524
        %v526 = vmul.f32 %v525, %v511
        %v527 = vadd.f32 %v462, %v526
        %s528 = sld [smem:[#allocation2 + $0x6a]]
        %v529 = vstv %s528
        %v530 = vmul.f32 %v529, %v511
        %v531 = vadd.f32 %v466, %v530
        %s532 = sld [smem:[#allocation2 + $0x43]]
        %s533 = sld [smem:[#allocation2 + $0xc]]
        %v534 = vstv %s533
        %v535 = vmul.f32 %v534, %v337
        %v536 = vstv %s532
        %v537 = vadd.f32 %v536, %v535
        %s538 = sld [smem:[#allocation2 + $0x4b]]
        %s539 = sld [smem:[#allocation2 + $0x2c]]
        %v540 = vstv %s539
        %v541 = vmul.f32 %v540, %v337
        %v542 = vstv %s538
        %v543 = vadd.f32 %v542, %v541
        %s544 = sld [smem:[#allocation2 + $0xd]]
        %v545 = vstv %s544
        %v546 = vmul.f32 %v545, %v339
        %v547 = vadd.f32 %v537, %v546
        %s548 = sld [smem:[#allocation2 + $0x2d]]
        %v549 = vstv %s548
        %v550 = vmul.f32 %v549, %v339
        %v551 = vadd.f32 %v543, %v550
        %s552 = sld [smem:[#allocation2 + $0xe]]
        %v553 = vstv %s552
        %v554 = vmul.f32 %v553, %v341
        %v555 = vadd.f32 %v547, %v554
        %s556 = sld [smem:[#allocation2 + $0x2e]]
        %v557 = vstv %s556
        %v558 = vmul.f32 %v557, %v341
        %v559 = vadd.f32 %v551, %v558
        %s560 = sld [smem:[#allocation2 + $0xf]]
        %v561 = vstv %s560
        %v562 = vmul.f32 %v561, %v343
        %v563 = vadd.f32 %v555, %v562
        %s564 = sld [smem:[#allocation2 + $0x2f]]
        %v565 = vstv %s564
        %v566 = vmul.f32 %v565, %v343
        %v567 = vadd.f32 %v559, %v566
        %v568 = vmax.f32 %v567, -30.0
        %v569 = vmin.f32 %v568, 20.0
        %v570 = vmul.f32 %v569, 0.5
        %v571 = vmul.f32 %v570, 1.442695
        %v572 = vpow.pop %v571
        %s573 = scalar_lea.vmem %s294, 6 [#allocation7]
        %v574 = vld [vmem:[%s573] sm:$0x3]
        %v575 = vmul.f32 %v572, %v574
        %v576 = vadd.f32 %v563, %v575
        %s577 = scalar_lea.vmem %s329, 6 [#allocation10]
        %578 = vst [vmem:[%s577] sm:$0x3] %v563
        %s579 = scalar_lea.vmem %s336, 6 [#allocation12]
        %580 = vst [vmem:[%s579] sm:$0x3] %v569
        %s581 = sld [smem:[#allocation2 + $0x53]]
        %v582 = vstv %s581
        %v583 = vmul.f32 %v582, %v576
        %v584 = vadd.f32 %v519, %v583
        %s585 = sld [smem:[#allocation2 + $0x5b]]
        %v586 = vstv %s585
        %v587 = vmul.f32 %v586, %v576
        %v588 = vadd.f32 %v523, %v587
        %s589 = sld [smem:[#allocation2 + $0x63]]
        %v590 = vstv %s589
        %v591 = vmul.f32 %v590, %v576
        %v592 = vadd.f32 %v527, %v591
        %s593 = sld [smem:[#allocation2 + $0x6b]]
        %v594 = vstv %s593
        %v595 = vmul.f32 %v594, %v576
        %v596 = vadd.f32 %v531, %v595
        %s597 = sld [smem:[#allocation2 + $0x44]]
        %s598 = sld [smem:[#allocation2 + $0x10]]
        %v599 = vstv %s598
        %v600 = vmul.f32 %v599, %v337
        %v601 = vstv %s597
        %v602 = vadd.f32 %v601, %v600
        %s603 = sld [smem:[#allocation2 + $0x4c]]
        %s604 = sld [smem:[#allocation2 + $0x30]]
        %v605 = vstv %s604
        %v606 = vmul.f32 %v605, %v337
        %v607 = vstv %s603
        %v608 = vadd.f32 %v607, %v606
        %s609 = sld [smem:[#allocation2 + $0x11]]
        %v610 = vstv %s609
        %v611 = vmul.f32 %v610, %v339
        %v612 = vadd.f32 %v602, %v611
        %s613 = sld [smem:[#allocation2 + $0x31]]
        %v614 = vstv %s613
        %v615 = vmul.f32 %v614, %v339
        %v616 = vadd.f32 %v608, %v615
        %s617 = sld [smem:[#allocation2 + $0x12]]
        %v618 = vstv %s617
        %v619 = vmul.f32 %v618, %v341
        %v620 = vadd.f32 %v612, %v619
        %s621 = sld [smem:[#allocation2 + $0x32]]
        %v622 = vstv %s621
        %v623 = vmul.f32 %v622, %v341
        %v624 = vadd.f32 %v616, %v623
        %s625 = sld [smem:[#allocation2 + $0x13]]
        %v626 = vstv %s625
        %v627 = vmul.f32 %v626, %v343
        %v628 = vadd.f32 %v620, %v627
        %s629 = sld [smem:[#allocation2 + $0x33]]
        %v630 = vstv %s629
        %v631 = vmul.f32 %v630, %v343
        %v632 = vadd.f32 %v624, %v631
        %v633 = vmax.f32 %v632, -30.0
        %v634 = vmin.f32 %v633, 20.0
        %v635 = vmul.f32 %v634, 0.5
        %v636 = vmul.f32 %v635, 1.442695
        %v637 = vpow.pop %v636
        %s638 = scalar_lea.vmem %s294, 8 [#allocation7]
        %v639 = vld [vmem:[%s638] sm:$0x3]
        %v640 = vmul.f32 %v637, %v639
        %v641 = vadd.f32 %v628, %v640
        %s642 = scalar_lea.vmem %s329, 8 [#allocation10]
        %643 = vst [vmem:[%s642] sm:$0x3] %v628
        %s644 = scalar_lea.vmem %s336, 8 [#allocation12]
        %645 = vst [vmem:[%s644] sm:$0x3] %v634
        %s646 = sld [smem:[#allocation2 + $0x54]]
        %v647 = vstv %s646
        %v648 = vmul.f32 %v647, %v641
        %v649 = vadd.f32 %v584, %v648
        %s650 = sld [smem:[#allocation2 + $0x5c]]
        %v651 = vstv %s650
        %v652 = vmul.f32 %v651, %v641
        %v653 = vadd.f32 %v588, %v652
        %s654 = sld [smem:[#allocation2 + $0x64]]
        %v655 = vstv %s654
        %v656 = vmul.f32 %v655, %v641
        %v657 = vadd.f32 %v592, %v656
        %s658 = sld [smem:[#allocation2 + $0x6c]]
        %v659 = vstv %s658
        %v660 = vmul.f32 %v659, %v641
        %v661 = vadd.f32 %v596, %v660
        %s662 = sld [smem:[#allocation2 + $0x45]]
        %s663 = sld [smem:[#allocation2 + $0x14]]
        %v664 = vstv %s663
        %v665 = vmul.f32 %v664, %v337
        %v666 = vstv %s662
        %v667 = vadd.f32 %v666, %v665
        %s668 = sld [smem:[#allocation2 + $0x4d]]
        %s669 = sld [smem:[#allocation2 + $0x34]]
        %v670 = vstv %s669
        %v671 = vmul.f32 %v670, %v337
        %v672 = vstv %s668
        %v673 = vadd.f32 %v672, %v671
        %s674 = sld [smem:[#allocation2 + $0x15]]
        %v675 = vstv %s674
        %v676 = vmul.f32 %v675, %v339
        %v677 = vadd.f32 %v667, %v676
        %s678 = sld [smem:[#allocation2 + $0x35]]
        %v679 = vstv %s678
        %v680 = vmul.f32 %v679, %v339
        %v681 = vadd.f32 %v673, %v680
        %s682 = sld [smem:[#allocation2 + $0x16]]
        %v683 = vstv %s682
        %v684 = vmul.f32 %v683, %v341
        %v685 = vadd.f32 %v677, %v684
        %s686 = sld [smem:[#allocation2 + $0x36]]
        %v687 = vstv %s686
        %v688 = vmul.f32 %v687, %v341
        %v689 = vadd.f32 %v681, %v688
        %s690 = sld [smem:[#allocation2 + $0x17]]
        %v691 = vstv %s690
        %v692 = vmul.f32 %v691, %v343
        %v693 = vadd.f32 %v685, %v692
        %s694 = sld [smem:[#allocation2 + $0x37]]
        %v695 = vstv %s694
        %v696 = vmul.f32 %v695, %v343
        %v697 = vadd.f32 %v689, %v696
        %v698 = vmax.f32 %v697, -30.0
        %v699 = vmin.f32 %v698, 20.0
        %v700 = vmul.f32 %v699, 0.5
        %v701 = vmul.f32 %v700, 1.442695
        %v702 = vpow.pop %v701
        %s703 = scalar_lea.vmem %s294, 10 [#allocation7]
        %v704 = vld [vmem:[%s703] sm:$0x3]
        %v705 = vmul.f32 %v702, %v704
        %v706 = vadd.f32 %v693, %v705
        %s707 = scalar_lea.vmem %s329, 10 [#allocation10]
        %708 = vst [vmem:[%s707] sm:$0x3] %v693
        %s709 = scalar_lea.vmem %s336, 10 [#allocation12]
        %710 = vst [vmem:[%s709] sm:$0x3] %v699
        %s711 = sld [smem:[#allocation2 + $0x55]]
        %v712 = vstv %s711
        %v713 = vmul.f32 %v712, %v706
        %v714 = vadd.f32 %v649, %v713
        %s715 = sld [smem:[#allocation2 + $0x5d]]
        %v716 = vstv %s715
        %v717 = vmul.f32 %v716, %v706
        %v718 = vadd.f32 %v653, %v717
        %s719 = sld [smem:[#allocation2 + $0x65]]
        %v720 = vstv %s719
        %v721 = vmul.f32 %v720, %v706
        %v722 = vadd.f32 %v657, %v721
        %s723 = sld [smem:[#allocation2 + $0x6d]]
        %v724 = vstv %s723
        %v725 = vmul.f32 %v724, %v706
        %v726 = vadd.f32 %v661, %v725
        %s727 = sld [smem:[#allocation2 + $0x46]]
        %s728 = sld [smem:[#allocation2 + $0x18]]
        %v729 = vstv %s728
        %v730 = vmul.f32 %v729, %v337
        %v731 = vstv %s727
        %v732 = vadd.f32 %v731, %v730
        %s733 = sld [smem:[#allocation2 + $0x4e]]
        %s734 = sld [smem:[#allocation2 + $0x38]]
        %v735 = vstv %s734
        %v736 = vmul.f32 %v735, %v337
        %v737 = vstv %s733
        %v738 = vadd.f32 %v737, %v736
        %s739 = sld [smem:[#allocation2 + $0x19]]
        %v740 = vstv %s739
        %v741 = vmul.f32 %v740, %v339
        %v742 = vadd.f32 %v732, %v741
        %s743 = sld [smem:[#allocation2 + $0x39]]
        %v744 = vstv %s743
        %v745 = vmul.f32 %v744, %v339
        %v746 = vadd.f32 %v738, %v745
        %s747 = sld [smem:[#allocation2 + $0x1a]]
        %v748 = vstv %s747
        %v749 = vmul.f32 %v748, %v341
        %v750 = vadd.f32 %v742, %v749
        %s751 = sld [smem:[#allocation2 + $0x3a]]
        %v752 = vstv %s751
        %v753 = vmul.f32 %v752, %v341
        %v754 = vadd.f32 %v746, %v753
        %s755 = sld [smem:[#allocation2 + $0x1b]]
        %v756 = vstv %s755
        %v757 = vmul.f32 %v756, %v343
        %v758 = vadd.f32 %v750, %v757
        %s759 = sld [smem:[#allocation2 + $0x3b]]
        %v760 = vstv %s759
        %v761 = vmul.f32 %v760, %v343
        %v762 = vadd.f32 %v754, %v761
        %v763 = vmax.f32 %v762, -30.0
        %v764 = vmin.f32 %v763, 20.0
        %v765 = vmul.f32 %v764, 0.5
        %v766 = vmul.f32 %v765, 1.442695
        %v767 = vpow.pop %v766
        %s768 = scalar_lea.vmem %s294, 12 [#allocation7]
        %v769 = vld [vmem:[%s768] sm:$0x3]
        %v770 = vmul.f32 %v767, %v769
        %v771 = vadd.f32 %v758, %v770
        %s772 = scalar_lea.vmem %s329, 12 [#allocation10]
        %773 = vst [vmem:[%s772] sm:$0x3] %v758
        %s774 = scalar_lea.vmem %s336, 12 [#allocation12]
        %775 = vst [vmem:[%s774] sm:$0x3] %v764
        %s776 = sld [smem:[#allocation2 + $0x56]]
        %v777 = vstv %s776
        %v778 = vmul.f32 %v777, %v771
        %v779 = vadd.f32 %v714, %v778
        %s780 = sld [smem:[#allocation2 + $0x5e]]
        %v781 = vstv %s780
        %v782 = vmul.f32 %v781, %v771
        %v783 = vadd.f32 %v718, %v782
        %s784 = sld [smem:[#allocation2 + $0x66]]
        %v785 = vstv %s784
        %v786 = vmul.f32 %v785, %v771
        %v787 = vadd.f32 %v722, %v786
        %s788 = sld [smem:[#allocation2 + $0x6e]]
        %v789 = vstv %s788
        %v790 = vmul.f32 %v789, %v771
        %v791 = vadd.f32 %v726, %v790
        %s792 = sld [smem:[#allocation2 + $0x47]]
        %s793 = sld [smem:[#allocation2 + $0x1c]]
        %v794 = vstv %s793
        %v795 = vmul.f32 %v794, %v337
        %v796 = vstv %s792
        %v797 = vadd.f32 %v796, %v795
        %s798 = sld [smem:[#allocation2 + $0x4f]]
        %s799 = sld [smem:[#allocation2 + $0x3c]]
        %v800 = vstv %s799
        %v801 = vmul.f32 %v800, %v337
        %v802 = vstv %s798
        %v803 = vadd.f32 %v802, %v801
        %s804 = sld [smem:[#allocation2 + $0x1d]]
        %v805 = vstv %s804
        %v806 = vmul.f32 %v805, %v339
        %v807 = vadd.f32 %v797, %v806
        %s808 = sld [smem:[#allocation2 + $0x3d]]
        %v809 = vstv %s808
        %v810 = vmul.f32 %v809, %v339
        %v811 = vadd.f32 %v803, %v810
        %s812 = sld [smem:[#allocation2 + $0x1e]]
        %v813 = vstv %s812
        %v814 = vmul.f32 %v813, %v341
        %v815 = vadd.f32 %v807, %v814
        %s816 = sld [smem:[#allocation2 + $0x3e]]
        %v817 = vstv %s816
        %v818 = vmul.f32 %v817, %v341
        %v819 = vadd.f32 %v811, %v818
        %s820 = sld [smem:[#allocation2 + $0x1f]]
        %v821 = vstv %s820
        %v822 = vmul.f32 %v821, %v343
        %v823 = vadd.f32 %v815, %v822
        %s824 = sld [smem:[#allocation2 + $0x3f]]
        %v825 = vstv %s824
        %v826 = vmul.f32 %v825, %v343
        %v827 = vadd.f32 %v819, %v826
        %v828 = vmax.f32 %v827, -30.0
        %v829 = vmin.f32 %v828, 20.0
        %v830 = vmul.f32 %v829, 0.5
        %v831 = vmul.f32 %v830, 1.442695
        %v832 = vpow.pop %v831
        %s833 = scalar_lea.vmem %s294, 14 [#allocation7]
        %v834 = vld [vmem:[%s833] sm:$0x3]
        %v835 = vmul.f32 %v832, %v834
        %v836 = vadd.f32 %v823, %v835
        %s837 = scalar_lea.vmem %s329, 14 [#allocation10]
        %838 = vst [vmem:[%s837] sm:$0x3] %v823
        %s839 = scalar_lea.vmem %s336, 14 [#allocation12]
        %840 = vst [vmem:[%s839] sm:$0x3] %v829
        %s841 = sld [smem:[#allocation2 + $0x57]]
        %v842 = vstv %s841
        %v843 = vmul.f32 %v842, %v836
        %v844 = vadd.f32 %v779, %v843
        %s845 = sld [smem:[#allocation2 + $0x5f]]
        %v846 = vstv %s845
        %v847 = vmul.f32 %v846, %v836
        %v848 = vadd.f32 %v783, %v847
        %s849 = sld [smem:[#allocation2 + $0x67]]
        %v850 = vstv %s849
        %v851 = vmul.f32 %v850, %v836
        %v852 = vadd.f32 %v787, %v851
        %s853 = sld [smem:[#allocation2 + $0x6f]]
        %v854 = vstv %s853
        %v855 = vmul.f32 %v854, %v836
        %v856 = vadd.f32 %v791, %v855
        %s857 = sld [smem:[#allocation2 + $0x70]]
        %v858 = vstv %s857
        %v859 = vadd.f32 %v844, %v858
        %860 = vst [vmem:[%s322] sm:$0x3] %v859
        %s861 = sld [smem:[#allocation2 + $0x71]]
        %v862 = vstv %s861
        %v863 = vadd.f32 %v848, %v862
        %s864 = scalar_lea.vmem %s322, 2 [#allocation9]
        %865 = vst [vmem:[%s864] sm:$0x3] %v863
        %s866 = sld [smem:[#allocation2 + $0x72]]
        %v867 = vstv %s866
        %v868 = vadd.f32 %v852, %v867
        %s869 = scalar_lea.vmem %s322, 4 [#allocation9]
        %870 = vst [vmem:[%s869] sm:$0x3] %v868
        %s871 = sld [smem:[#allocation2 + $0x73]]
        %v872 = vstv %s871
        %v873 = vadd.f32 %v856, %v872
        %s874 = scalar_lea.vmem %s322, 6 [#allocation9]
        %875 = vst [vmem:[%s874] sm:$0x3] %v873
        %s876 = sand.u32 %s129, 1
        %s877 = scalar_lea.sflag [#allocation4], %s876
        %s878 = sand.u32 %s129, 1
        %s879 = smul.addr %s878, 8
        %s880 = scalar_lea.vmem [#allocation9], %s879
        %s881 = sand.u32 %s30, 1
        %s882 = scalar_lea.sflag [#allocation11], %s881
        %s883 = sand.u32 %s157, 1
        %s884 = smul.addr %s883, 16
        %s885 = scalar_lea.vmem [#allocation10], %s884
        %s886 = sand.u32 %s30, 1
        %s887 = scalar_lea.sflag [#allocation11], %s886
        %s888 = sand.u32 %s185, 1
        %s889 = smul.addr %s888, 16
        %s890 = scalar_lea.vmem [#allocation12], %s889
        // Predicated region
        $region45: #{tpu_custom_call.1} parent=31 // pred_check
          %p891 = pneg %p139
        $region46: #{tpu_custom_call.1} parent=31 // pred_check_branch
          %893 = sbr.rel (%p891) target = $region48
        $region47: #{tpu_custom_call.1} parent=31 // pred_region
          %s895 = ssub.s32 128, 128
          %896 = vsyncadd %s877, %s895
          %s897 = smul.addr %s34, 4
          %s898 = sadd.s32 %s35, %s897
          %s899 = smul.addr %s898, 32
          %s900 = scalar_lea.hbm %s3, %s899
          %s901 = sshll.u32 %s880, 4
          %s902 = int_to_ptr.vmem [resolvable:$true] %s901
          %907 = dma.vmem_to_hbm [thread:$0]  %s902, 128, %s900, %s877, 32, 32, 2
        $region48: #{tpu_custom_call.1} parent=31 // pred_fallthru
          _
        // Predicated region
        $region49: #{tpu_custom_call.1} parent=31 // pred_check
          %p908 = pneg %p167
        $region50: #{tpu_custom_call.1} parent=31 // pred_check_branch
          %910 = sbr.rel (%p908) target = $region52
        $region51: #{tpu_custom_call.1} parent=31 // pred_region
          %s912 = ssub.s32 256, 256
          %913 = vsyncadd %s882, %s912
          %s914 = smul.addr %s34, 8
          %s915 = sadd.s32 %s35, %s914
          %s916 = smul.addr %s915, 32
          %s917 = scalar_lea.hbm %s4, %s916
          %s918 = sshll.u32 %s885, 4
          %s919 = int_to_ptr.vmem [resolvable:$true] %s918
          %924 = dma.vmem_to_hbm [thread:$0]  %s919, 256, %s917, %s882, 32, 32, 2
        $region52: #{tpu_custom_call.1} parent=31 // pred_fallthru
          _
        // Predicated region
        $region53: #{tpu_custom_call.1} parent=31 // pred_check
          %p925 = pneg %p195
        $region54: #{tpu_custom_call.1} parent=31 // pred_check_branch
          %927 = sbr.rel (%p925) target = $region56
        $region55: #{tpu_custom_call.1} parent=31 // pred_region
          %s929 = ssub.s32 256, 256
          %930 = vsyncadd %s887, %s929
          %s931 = smul.addr %s34, 8
          %s932 = sadd.s32 %s35, %s931
          %s933 = smul.addr %s932, 32
          %s934 = scalar_lea.hbm %s5, %s933
          %s935 = sshll.u32 %s890, 4
          %s936 = int_to_ptr.vmem [resolvable:$true] %s935
          %941 = dma.vmem_to_hbm [thread:$0]  %s936, 256, %s934, %s887, 32, 32, 2
        $region56: #{tpu_custom_call.1} parent=31 // pred_fallthru
          _
      $region32: #{tpu_custom_call.1} parent=5 // pred_fallthru
        _
      %p942 = scmp.le.s32.totalorder 2, %s25
      // Predicated region
      $region57: #{tpu_custom_call.1} parent=5 // pred_check
        %p943 = pneg %p942
      $region58: #{tpu_custom_call.1} parent=5 // pred_check_branch
        %945 = sbr.rel (%p943) target = $region60
      $region59: #{tpu_custom_call.1} parent=5 // pred_region
        %s946 = ssub.s32 %s25, 2
        // Predicated region
        $region61: #{tpu_custom_call.1} parent=59 // pred_check
          %p947 = pneg %p145
        $region62: #{tpu_custom_call.1} parent=59 // pred_check_branch
          %949 = sbr.rel (%p947) target = $region64
        $region63: #{tpu_custom_call.1} parent=59 // pred_region
          %s950 = sand.u32 %s130, 1
          %s951 = scalar_lea.sflag [#allocation4], %s950
          %s952 = sand.u32 %s130, 1
          %s953 = smul.addr %s952, 8
          %s954 = scalar_lea.vmem [#allocation9], %s953
          %955 = dma.done %s951, 128
        $region64: #{tpu_custom_call.1} parent=59 // pred_fallthru
          _
        // Predicated region
        $region65: #{tpu_custom_call.1} parent=59 // pred_check
          %p956 = pneg %p173
        $region66: #{tpu_custom_call.1} parent=59 // pred_check_branch
          %958 = sbr.rel (%p956) target = $region68
        $region67: #{tpu_custom_call.1} parent=59 // pred_region
          %s959 = sand.u32 %s31, 1
          %s960 = scalar_lea.sflag [#allocation11], %s959
          %s961 = sand.u32 %s158, 1
          %s962 = smul.addr %s961, 16
          %s963 = scalar_lea.vmem [#allocation10], %s962
          %964 = dma.done %s960, 256
        $region68: #{tpu_custom_call.1} parent=59 // pred_fallthru
          _
        // Predicated region
        $region69: #{tpu_custom_call.1} parent=59 // pred_check
          %p965 = pneg %p201
        $region70: #{tpu_custom_call.1} parent=59 // pred_check_branch
          %967 = sbr.rel (%p965) target = $region72
        $region71: #{tpu_custom_call.1} parent=59 // pred_region
          %s968 = sand.u32 %s31, 1
          %s969 = scalar_lea.sflag [#allocation11], %s968
          %s970 = sand.u32 %s186, 1
          %s971 = smul.addr %s970, 16
          %s972 = scalar_lea.vmem [#allocation12], %s971
          %973 = dma.done %s969, 256
        $region72: #{tpu_custom_call.1} parent=59 // pred_fallthru
          _
      $region60: #{tpu_custom_call.1} parent=5 // pred_fallthru
        _
    $region6: #{tpu_custom_call.1} parent=1 // loop_footer
      %s29 = sadd.s32 1, %s25
    $region7: #{tpu_custom_call.1} parent=1 // loop_footer_branch
      %24 = sbr.rel target = $region3
    $region8: #{tpu_custom_call.1} parent=1 // loop_exit
      _
    %974 = vsyncpa [#allocation3], 1
    %s975 = scalar_lea.sflag [#allocation3], 1
    %976 = vsyncpa %s975, 1
    %977 = vsyncpa [#allocation8], 1
    %s978 = scalar_lea.sflag [#allocation8], 1
    %979 = vsyncpa %s978, 1
    %980 = vsyncpa [#allocation4], 1
    %s981 = scalar_lea.sflag [#allocation4], 1
    %982 = vsyncpa %s981, 1
    %983 = vsyncpa [#allocation11], 1
    %s984 = scalar_lea.sflag [#allocation11], 1
    %985 = vsyncpa %s984, 1
    %986 = vsyncpa [#allocation5], 1
    %s987 = scalar_lea.sflag [#allocation5], 1
    %988 = vsyncpa %s987, 1

</llo_original>
